<compile_context>
chip_gen: v7x
topology: tpu7x:2x2x1
jax: 0.10.0
libtpu: 0.0.40
codegen_flags: <defaults>
</compile_context>

<pallas_src>
import jax
import jax.numpy as jnp
from jax.experimental import pallas as pl
from jax.experimental.pallas import tpu as pltpu

HEAD_PAD = 128  # pad the 2-wide head output to a lane-dense 128 columns


def siamese_kernel(x_ref,
                   w1_ref, b1_ref, w2_ref, b2_ref,
                   w3_ref, b3_ref, w4_ref, b4_ref,
                   w5_ref, b5_ref, w6_ref, b6_ref,
                   out_ref):
    """One grid step processes a (2, tb, in_dim) tile holding BOTH branches of tb pairs."""

    def linear(x, w_ref, b_ref):
        # bf16 x bf16 on the MXU, f32 accumulate; bias / activation math stays f32.
        return (jnp.dot(x.astype(jnp.bfloat16), w_ref[...],
                        preferred_element_type=jnp.float32)
                + b_ref[...])

    def linear_relu(x, w_ref, b_ref):
        return jnp.maximum(linear(x, w_ref, b_ref), 0.0)

    x = x_ref[...]                        # (2, tb, in_dim)
    tb = x.shape[1]
    h = x.reshape(2 * tb, x.shape[2])     # fuse both branches into one matmul chain
    h = linear_relu(h, w1_ref, b1_ref)    # -> (2*tb, 256)
    h = linear_relu(h, w2_ref, b2_ref)    # -> (2*tb, 512)
    h = linear_relu(h, w3_ref, b3_ref)    # -> (2*tb, 256)
    h = linear_relu(h, w4_ref, b4_ref)    # -> (2*tb, 16)

    mid = jnp.abs(h[:tb] - h[tb:])        # |y1 - y2|, (tb, 16)

    f = linear_relu(mid, w5_ref, b5_ref)  # -> (tb, 128)
    logits = linear(f, w6_ref, b6_ref)    # -> (tb, 128); cols >= 2 are zero padding
    out_ref[...] = jax.nn.sigmoid(logits)


def siamese_forward(x1, x2, params, *, block_b=256):
    B, in_dim = x1.shape
    block_b = min(block_b, B)
    steps = pl.cdiv(B, block_b)
    B_pad = steps * block_b

    if B_pad != B:
        pad = B_pad - B
        x1 = jnp.pad(x1, ((0, pad), (0, 0)))
        x2 = jnp.pad(x2, ((0, pad), (0, 0)))
    x = jnp.stack([x1, x2], axis=0)       # (2, B_pad, in_dim)

    # bf16 weights (halves HBM traffic, enables bf16 MXU path), f32 biases.
    ws = [p.astype(jnp.bfloat16) for p in params[0::2]]
    bs = [p.astype(jnp.float32) for p in params[1::2]]
    # Lane-dense head: pad 128->2 layer to 128 output columns with zeros.
    ws[-1] = jnp.pad(ws[-1], ((0, 0), (0, HEAD_PAD - ws[-1].shape[1])))
    bs[-1] = jnp.pad(bs[-1], ((0, 0), (0, HEAD_PAD - bs[-1].shape[1])))
    flat_params = []
    for w, b in zip(ws, bs):
        flat_params.extend([w, b])

    def resident(shape):
        return pl.BlockSpec(shape, lambda i: (0,) * len(shape))

    in_specs = [pl.BlockSpec((2, block_b, in_dim), lambda i: (0, i, 0))]
    in_specs += [resident(p.shape) for p in flat_params]
    out_specs = pl.BlockSpec((block_b, HEAD_PAD), lambda i: (i, 0))

    # Advisory cost estimate so XLA schedules surrounding ops around this call.
    trunk_flops = 2 * (2 * B_pad) * (in_dim * 256 + 256 * 512 + 512 * 256 + 256 * 16)
    head_flops = 2 * B_pad * (16 * 128 + 128 * HEAD_PAD)
    param_bytes = sum(int(p.size) * p.dtype.itemsize for p in flat_params)
    bytes_accessed = int(x.size) * 4 + B_pad * HEAD_PAD * 4 + param_bytes

    out = pl.pallas_call(
        siamese_kernel,
        out_shape=jax.ShapeDtypeStruct((B_pad, HEAD_PAD), jnp.float32),
        grid=(steps,),
        in_specs=in_specs,
        out_specs=out_specs,
        compiler_params=pltpu.CompilerParams(
            dimension_semantics=("parallel",)),
        cost_estimate=pl.CostEstimate(
            flops=int(trunk_flops + head_flops),
            transcendentals=int(B_pad * HEAD_PAD),
            bytes_accessed=int(bytes_accessed)),
    )(x, *flat_params)

    return out[:B, :2]


def init_params(in_dim, key):
    """Deterministic synthetic parameters. Weight layout: (in_features, out_features)."""
    dims = [(in_dim, 256), (256, 512), (512, 256), (256, 16), (16, 128), (128, 2)]
    params = []
    for fan_in, fan_out in dims:
        kw, kb, key = jax.random.split(key, 3)
        scale = 1.0 / jnp.sqrt(jnp.float32(fan_in))
        w = jax.random.uniform(kw, (fan_in, fan_out), jnp.float32, -scale, scale)
        b = jax.random.uniform(kb, (1, fan_out), jnp.float32, -scale, scale)
        params.extend([w, b])
    return params


if __name__ == "__main__":
    in_dim = 32
    batch = 8

    key = jax.random.PRNGKey(0)
    k1, k2, kp = jax.random.split(key, 3)
    x1 = jax.random.normal(k1, (batch, in_dim), dtype=jnp.float32)
    x2 = jax.random.normal(k2, (batch, in_dim), dtype=jnp.float32)
    params = init_params(in_dim, kp)

    out = siamese_forward(x1, x2, params)
    jax.block_until_ready(out)

    assert out.shape == (batch, 2)
    assert bool(jnp.all(jnp.isfinite(out)))
    assert bool(jnp.all((out >= 0.0) & (out <= 1.0)))  # sigmoid range
    print("KERNEL_OK")
</pallas_src>

<mosaic_0001>
module attributes {stable_mosaic.version = 11 : i64} {
  func.func @siamese_kernel(%arg0: i32, %arg1: memref<2x8x32xf32, #tpu.memory_space<vmem>>, %arg2: memref<32x256xbf16, #tpu.memory_space<vmem>>, %arg3: memref<1x256xf32, #tpu.memory_space<vmem>>, %arg4: memref<256x512xbf16, #tpu.memory_space<vmem>>, %arg5: memref<1x512xf32, #tpu.memory_space<vmem>>, %arg6: memref<512x256xbf16, #tpu.memory_space<vmem>>, %arg7: memref<1x256xf32, #tpu.memory_space<vmem>>, %arg8: memref<256x16xbf16, #tpu.memory_space<vmem>>, %arg9: memref<1x16xf32, #tpu.memory_space<vmem>>, %arg10: memref<16x128xbf16, #tpu.memory_space<vmem>>, %arg11: memref<1x128xf32, #tpu.memory_space<vmem>>, %arg12: memref<128x128xbf16, #tpu.memory_space<vmem>>, %arg13: memref<1x128xf32, #tpu.memory_space<vmem>>, %arg14: memref<8x128xf32, #tpu.memory_space<vmem>>) attributes {dimension_semantics = [#tpu.dimension_semantics<parallel>], iteration_bounds = array<i64: 1>, scalar_prefetch = 0 : i64, scratch_operands = 0 : i64, tpu.core_type = #tpu.core_type<tc>, window_params = [{transform_indices = @transform_0, window_bounds = array<i64: 2, 8, 32>}, {pipeline_mode = #tpu.pipeline_mode<synchronous>, transform_indices = @transform_1, window_bounds = array<i64: 32, 256>}, {pipeline_mode = #tpu.pipeline_mode<synchronous>, transform_indices = @transform_2, window_bounds = array<i64: 1, 256>}, {pipeline_mode = #tpu.pipeline_mode<synchronous>, transform_indices = @transform_3, window_bounds = array<i64: 256, 512>}, {pipeline_mode = #tpu.pipeline_mode<synchronous>, transform_indices = @transform_4, window_bounds = array<i64: 1, 512>}, {pipeline_mode = #tpu.pipeline_mode<synchronous>, transform_indices = @transform_5, window_bounds = array<i64: 512, 256>}, {pipeline_mode = #tpu.pipeline_mode<synchronous>, transform_indices = @transform_6, window_bounds = array<i64: 1, 256>}, {pipeline_mode = #tpu.pipeline_mode<synchronous>, transform_indices = @transform_7, window_bounds = array<i64: 256, 16>}, {pipeline_mode = #tpu.pipeline_mode<synchronous>, transform_indices = @transform_8, window_bounds = array<i64: 1, 16>}, {pipeline_mode = #tpu.pipeline_mode<synchronous>, transform_indices = @transform_9, window_bounds = array<i64: 16, 128>}, {pipeline_mode = #tpu.pipeline_mode<synchronous>, transform_indices = @transform_10, window_bounds = array<i64: 1, 128>}, {pipeline_mode = #tpu.pipeline_mode<synchronous>, transform_indices = @transform_11, window_bounds = array<i64: 128, 128>}, {pipeline_mode = #tpu.pipeline_mode<synchronous>, transform_indices = @transform_12, window_bounds = array<i64: 1, 128>}, {transform_indices = @transform_13, window_bounds = array<i64: 8, 128>}]} {
    %c0 = arith.constant 0 : index
    %c0_0 = arith.constant 0 : index
    %c0_1 = arith.constant 0 : index
    %0 = vector.load %arg1[%c0, %c0_0, %c0_1] : memref<2x8x32xf32, #tpu.memory_space<vmem>>, vector<2x8x32xf32>
    %1 = vector.shape_cast %0 : vector<2x8x32xf32> to vector<16x32xf32>
    %2 = arith.truncf %1 : vector<16x32xf32> to vector<16x32xbf16>
    %c0_2 = arith.constant 0 : index
    %c0_3 = arith.constant 0 : index
    %3 = vector.load %arg2[%c0_2, %c0_3] : memref<32x256xbf16, #tpu.memory_space<vmem>>, vector<32x256xbf16>
    %cst = arith.constant dense<0.000000e+00> : vector<16x256xf32>
    %4 = tpu.matmul %2, %3, %cst {dimension_numbers = #tpu.dot_dimension_numbers<[1], [0], [0], [1], [0, 0, 1, 1], [], []>} : vector<16x32xbf16>, vector<32x256xbf16>, vector<16x256xf32> -> vector<16x256xf32>
    %c0_4 = arith.constant 0 : index
    %c0_5 = arith.constant 0 : index
    %5 = vector.load %arg3[%c0_4, %c0_5] : memref<1x256xf32, #tpu.memory_space<vmem>>, vector<1x256xf32>
    %6 = vector.broadcast %5 : vector<1x256xf32> to vector<16x256xf32>
    %7 = arith.addf %4, %6 : vector<16x256xf32>
    %cst_6 = arith.constant 0.000000e+00 : f32
    %8 = vector.broadcast %cst_6 : f32 to vector<16x256xf32>
    %9 = arith.maximumf %7, %8 : vector<16x256xf32>
    %10 = arith.truncf %9 : vector<16x256xf32> to vector<16x256xbf16>
    %c0_7 = arith.constant 0 : index
    %c0_8 = arith.constant 0 : index
    %11 = vector.load %arg4[%c0_7, %c0_8] : memref<256x512xbf16, #tpu.memory_space<vmem>>, vector<256x512xbf16>
    %cst_9 = arith.constant dense<0.000000e+00> : vector<16x512xf32>
    %12 = tpu.matmul %10, %11, %cst_9 {dimension_numbers = #tpu.dot_dimension_numbers<[1], [0], [0], [1], [0, 0, 1, 1], [], []>} : vector<16x256xbf16>, vector<256x512xbf16>, vector<16x512xf32> -> vector<16x512xf32>
    %c0_10 = arith.constant 0 : index
    %c0_11 = arith.constant 0 : index
    %13 = vector.load %arg5[%c0_10, %c0_11] : memref<1x512xf32, #tpu.memory_space<vmem>>, vector<1x512xf32>
    %14 = vector.broadcast %13 : vector<1x512xf32> to vector<16x512xf32>
    %15 = arith.addf %12, %14 : vector<16x512xf32>
    %cst_12 = arith.constant 0.000000e+00 : f32
    %16 = vector.broadcast %cst_12 : f32 to vector<16x512xf32>
    %17 = arith.maximumf %15, %16 : vector<16x512xf32>
    %18 = arith.truncf %17 : vector<16x512xf32> to vector<16x512xbf16>
    %c0_13 = arith.constant 0 : index
    %c0_14 = arith.constant 0 : index
    %19 = vector.load %arg6[%c0_13, %c0_14] : memref<512x256xbf16, #tpu.memory_space<vmem>>, vector<512x256xbf16>
    %cst_15 = arith.constant dense<0.000000e+00> : vector<16x256xf32>
    %20 = tpu.matmul %18, %19, %cst_15 {dimension_numbers = #tpu.dot_dimension_numbers<[1], [0], [0], [1], [0, 0, 1, 1], [], []>} : vector<16x512xbf16>, vector<512x256xbf16>, vector<16x256xf32> -> vector<16x256xf32>
    %c0_16 = arith.constant 0 : index
    %c0_17 = arith.constant 0 : index
    %21 = vector.load %arg7[%c0_16, %c0_17] : memref<1x256xf32, #tpu.memory_space<vmem>>, vector<1x256xf32>
    %22 = vector.broadcast %21 : vector<1x256xf32> to vector<16x256xf32>
    %23 = arith.addf %20, %22 : vector<16x256xf32>
    %cst_18 = arith.constant 0.000000e+00 : f32
    %24 = vector.broadcast %cst_18 : f32 to vector<16x256xf32>
    %25 = arith.maximumf %23, %24 : vector<16x256xf32>
    %26 = arith.truncf %25 : vector<16x256xf32> to vector<16x256xbf16>
    %c0_19 = arith.constant 0 : index
    %c0_20 = arith.constant 0 : index
    %27 = vector.load %arg8[%c0_19, %c0_20] : memref<256x16xbf16, #tpu.memory_space<vmem>>, vector<256x16xbf16>
    %cst_21 = arith.constant dense<0.000000e+00> : vector<16x16xf32>
    %28 = tpu.matmul %26, %27, %cst_21 {dimension_numbers = #tpu.dot_dimension_numbers<[1], [0], [0], [1], [0, 0, 1, 1], [], []>} : vector<16x256xbf16>, vector<256x16xbf16>, vector<16x16xf32> -> vector<16x16xf32>
    %c0_22 = arith.constant 0 : index
    %c0_23 = arith.constant 0 : index
    %29 = vector.load %arg9[%c0_22, %c0_23] : memref<1x16xf32, #tpu.memory_space<vmem>>, vector<1x16xf32>
    %30 = vector.broadcast %29 : vector<1x16xf32> to vector<16x16xf32>
    %31 = arith.addf %28, %30 : vector<16x16xf32>
    %cst_24 = arith.constant 0.000000e+00 : f32
    %32 = vector.broadcast %cst_24 : f32 to vector<16x16xf32>
    %33 = arith.maximumf %31, %32 : vector<16x16xf32>
    %34 = vector.extract_strided_slice %33 {offsets = [0, 0], sizes = [8, 16], strides = [1, 1]} : vector<16x16xf32> to vector<8x16xf32>
    %35 = vector.extract_strided_slice %33 {offsets = [8, 0], sizes = [8, 16], strides = [1, 1]} : vector<16x16xf32> to vector<8x16xf32>
    %36 = arith.subf %34, %35 : vector<8x16xf32>
    %37 = math.absf %36 : vector<8x16xf32>
    %38 = arith.truncf %37 : vector<8x16xf32> to vector<8x16xbf16>
    %c0_25 = arith.constant 0 : index
    %c0_26 = arith.constant 0 : index
    %39 = vector.load %arg10[%c0_25, %c0_26] : memref<16x128xbf16, #tpu.memory_space<vmem>>, vector<16x128xbf16>
    %cst_27 = arith.constant dense<0.000000e+00> : vector<8x128xf32>
    %40 = tpu.matmul %38, %39, %cst_27 {dimension_numbers = #tpu.dot_dimension_numbers<[1], [0], [0], [1], [0, 0, 1, 1], [], []>} : vector<8x16xbf16>, vector<16x128xbf16>, vector<8x128xf32> -> vector<8x128xf32>
    %c0_28 = arith.constant 0 : index
    %c0_29 = arith.constant 0 : index
    %41 = vector.load %arg11[%c0_28, %c0_29] : memref<1x128xf32, #tpu.memory_space<vmem>>, vector<1x128xf32>
    %42 = vector.broadcast %41 : vector<1x128xf32> to vector<8x128xf32>
    %43 = arith.addf %40, %42 : vector<8x128xf32>
    %cst_30 = arith.constant 0.000000e+00 : f32
    %44 = vector.broadcast %cst_30 : f32 to vector<8x128xf32>
    %45 = arith.maximumf %43, %44 : vector<8x128xf32>
    %46 = arith.truncf %45 : vector<8x128xf32> to vector<8x128xbf16>
    %c0_31 = arith.constant 0 : index
    %c0_32 = arith.constant 0 : index
    %47 = vector.load %arg12[%c0_31, %c0_32] : memref<128x128xbf16, #tpu.memory_space<vmem>>, vector<128x128xbf16>
    %cst_33 = arith.constant dense<0.000000e+00> : vector<8x128xf32>
    %48 = tpu.matmul %46, %47, %cst_33 {dimension_numbers = #tpu.dot_dimension_numbers<[1], [0], [0], [1], [0, 0, 1, 1], [], []>} : vector<8x128xbf16>, vector<128x128xbf16>, vector<8x128xf32> -> vector<8x128xf32>
    %c0_34 = arith.constant 0 : index
    %c0_35 = arith.constant 0 : index
    %49 = vector.load %arg13[%c0_34, %c0_35] : memref<1x128xf32, #tpu.memory_space<vmem>>, vector<1x128xf32>
    %50 = vector.broadcast %49 : vector<1x128xf32> to vector<8x128xf32>
    %51 = arith.addf %48, %50 : vector<8x128xf32>
    %52 = arith.negf %51 : vector<8x128xf32>
    %53 = math.exp %52 : vector<8x128xf32>
    %cst_36 = arith.constant 1.000000e+00 : f32
    %54 = vector.broadcast %cst_36 : f32 to vector<8x128xf32>
    %55 = arith.addf %54, %53 : vector<8x128xf32>
    %56 = arith.divf %54, %55 : vector<8x128xf32>
    %c0_37 = arith.constant 0 : index
    %c0_38 = arith.constant 0 : index
    %57 = vector.load %arg14[%c0_37, %c0_38] : memref<8x128xf32, #tpu.memory_space<vmem>>, vector<8x128xf32>
    tpu.vector_store %arg14[%c0_37, %c0_38], %56 {strides = array<i32>} : memref<8x128xf32, #tpu.memory_space<vmem>>, vector<8x128xf32>,
    return
  }
  func.func @transform_0(%arg0: i32) -> (i32, i32, i32) {
    %c0_i32 = arith.constant 0 : i32
    %c0_i32_0 = arith.constant 0 : i32
    %c0_i32_1 = arith.constant 0 : i32
    return %c0_i32, %arg0, %c0_i32_0 : i32, i32, i32
  }
  func.func @transform_1(%arg0: i32) -> (i32, i32) {
    %c0_i32 = arith.constant 0 : i32
    %c0_i32_0 = arith.constant 0 : i32
    %c0_i32_1 = arith.constant 0 : i32
    return %c0_i32, %c0_i32_0 : i32, i32
  }
  func.func @transform_2(%arg0: i32) -> (i32, i32) {
    %c0_i32 = arith.constant 0 : i32
    %c0_i32_0 = arith.constant 0 : i32
    %c0_i32_1 = arith.constant 0 : i32
    return %c0_i32, %c0_i32_0 : i32, i32
  }
  func.func @transform_3(%arg0: i32) -> (i32, i32) {
    %c0_i32 = arith.constant 0 : i32
    %c0_i32_0 = arith.constant 0 : i32
    %c0_i32_1 = arith.constant 0 : i32
    return %c0_i32, %c0_i32_0 : i32, i32
  }
  func.func @transform_4(%arg0: i32) -> (i32, i32) {
    %c0_i32 = arith.constant 0 : i32
    %c0_i32_0 = arith.constant 0 : i32
    %c0_i32_1 = arith.constant 0 : i32
    return %c0_i32, %c0_i32_0 : i32, i32
  }
  func.func @transform_5(%arg0: i32) -> (i32, i32) {
    %c0_i32 = arith.constant 0 : i32
    %c0_i32_0 = arith.constant 0 : i32
    %c0_i32_1 = arith.constant 0 : i32
    return %c0_i32, %c0_i32_0 : i32, i32
  }
  func.func @transform_6(%arg0: i32) -> (i32, i32) {
    %c0_i32 = arith.constant 0 : i32
    %c0_i32_0 = arith.constant 0 : i32
    %c0_i32_1 = arith.constant 0 : i32
    return %c0_i32, %c0_i32_0 : i32, i32
  }
  func.func @transform_7(%arg0: i32) -> (i32, i32) {
    %c0_i32 = arith.constant 0 : i32
    %c0_i32_0 = arith.constant 0 : i32
    %c0_i32_1 = arith.constant 0 : i32
    return %c0_i32, %c0_i32_0 : i32, i32
  }
  func.func @transform_8(%arg0: i32) -> (i32, i32) {
    %c0_i32 = arith.constant 0 : i32
    %c0_i32_0 = arith.constant 0 : i32
    %c0_i32_1 = arith.constant 0 : i32
    return %c0_i32, %c0_i32_0 : i32, i32
  }
  func.func @transform_9(%arg0: i32) -> (i32, i32) {
    %c0_i32 = arith.constant 0 : i32
    %c0_i32_0 = arith.constant 0 : i32
    %c0_i32_1 = arith.constant 0 : i32
    return %c0_i32, %c0_i32_0 : i32, i32
  }
  func.func @transform_10(%arg0: i32) -> (i32, i32) {
    %c0_i32 = arith.constant 0 : i32
    %c0_i32_0 = arith.constant 0 : i32
    %c0_i32_1 = arith.constant 0 : i32
    return %c0_i32, %c0_i32_0 : i32, i32
  }
  func.func @transform_11(%arg0: i32) -> (i32, i32) {
    %c0_i32 = arith.constant 0 : i32
    %c0_i32_0 = arith.constant 0 : i32
    %c0_i32_1 = arith.constant 0 : i32
    return %c0_i32, %c0_i32_0 : i32, i32
  }
  func.func @transform_12(%arg0: i32) -> (i32, i32) {
    %c0_i32 = arith.constant 0 : i32
    %c0_i32_0 = arith.constant 0 : i32
    %c0_i32_1 = arith.constant 0 : i32
    return %c0_i32, %c0_i32_0 : i32, i32
  }
  func.func @transform_13(%arg0: i32) -> (i32, i32) {
    %c0_i32 = arith.constant 0 : i32
    %c0_i32_0 = arith.constant 0 : i32
    return %arg0, %c0_i32 : i32, i32
  }
}

</mosaic_0001>

<llo_original>
// kernel: tpu_custom_call.1
$region0: #{tpu_custom_call.1}
  #allocation0 [shape = 'u32[]', space=smem, size = 0x4, offset = 0x4, fixed_abs, tag = 'smem constant byte address 0x4 - core index']
  #allocation1 [shape = 'u32[144,128]{1,0:T(1,128)}', space=vmem, size = 0x12000, scoped, tag = 'internal scratch']
  %s0 = inlined_call_operand.vmem [shape: f32[2,8,32], index: 0, kind: input, shape index: {}]
  %s1 = inlined_call_operand.vmem [shape: bf16[32,256], index: 1, kind: input, shape index: {}]
  %s2 = inlined_call_operand.vmem [shape: f32[1,256], index: 2, kind: input, shape index: {}]
  %s3 = inlined_call_operand.hbm [shape: bf16[256,512], index: 3, kind: input, shape index: {}]
  %s4 = inlined_call_operand.vmem [shape: f32[1,512], index: 4, kind: input, shape index: {}]
  %s5 = inlined_call_operand.hbm [shape: bf16[512,256], index: 5, kind: input, shape index: {}]
  %s6 = inlined_call_operand.vmem [shape: f32[1,256], index: 6, kind: input, shape index: {}]
  %s7 = inlined_call_operand.vmem [shape: bf16[256,16], index: 7, kind: input, shape index: {}]
  %s8 = inlined_call_operand.vmem [shape: f32[1,16], index: 8, kind: input, shape index: {}]
  %s9 = inlined_call_operand.vmem [shape: bf16[16,128], index: 9, kind: input, shape index: {}]
  %s10 = inlined_call_operand.vmem [shape: f32[1,128], index: 10, kind: input, shape index: {}]
  %s11 = inlined_call_operand.vmem [shape: bf16[128,128], index: 11, kind: input, shape index: {}]
  %s12 = inlined_call_operand.vmem [shape: f32[1,128], index: 12, kind: input, shape index: {}]
  %s13 = inlined_call_operand.hbm [shape: f32[8,128], index: 13, kind: output, shape index: {}]
  %s14 = sld [smem:[#allocation0]]
  $region70: #{tpu_custom_call.1} parent=0
    _
  %s16 = ssub.s32 1, %s14
  %s17 = scalar_select 0, %s16, %s14
  $region1: #{tpu_custom_call.1} parent=0
    #allocation2 [shape = 'u8[262144]{0}', space=vmem, size = 0x40000, scoped, tag = 'input window, operand 3, single buffered']
    #allocation3 [shape = 's32[1]{0}', space=sflag, size = 0x4, scoped, tag = 'scoped memory for tpu_custom_call.1']
    #allocation4 [shape = 's32[1]{0}', space=sflag, size = 0x4, scoped, tag = 'scoped memory for tpu_custom_call.1']
    #allocation5 [shape = 'u8[262144]{0}', space=vmem, size = 0x40000, scoped, tag = 'input window, operand 5, single buffered']
    #allocation6 [shape = 's32[1]{0}', space=sflag, size = 0x4, scoped, tag = 'scoped memory for tpu_custom_call.1']
    #allocation7 [shape = 'u8[4096]{0}', space=vmem, size = 0x1000, scoped, tag = 'output window, operand 0, single buffered']
    %18 = vsyncpa [#allocation3], 0
    %19 = vsyncpa [#allocation6], 0
    %20 = vsyncpa [#allocation4], 0
    // Predicated region
    $region2: #{tpu_custom_call.1} parent=1 // pred_check
      _
    $region3: #{tpu_custom_call.1} parent=1 // pred_check_branch
      %22 = sbr.rel (0) target = $region5
    $region4: #{tpu_custom_call.1} parent=1 // pred_region
      _
    $region5: #{tpu_custom_call.1} parent=1 // pred_fallthru
      _
    // Predicated region
    $region6: #{tpu_custom_call.1} parent=1 // pred_check
      _
    $region7: #{tpu_custom_call.1} parent=1 // pred_check_branch
      %24 = sbr.rel (0) target = $region9
    $region8: #{tpu_custom_call.1} parent=1 // pred_region
      _
    $region9: #{tpu_custom_call.1} parent=1 // pred_fallthru
      _
    // Predicated region
    $region10: #{tpu_custom_call.1} parent=1 // pred_check
      _
    $region11: #{tpu_custom_call.1} parent=1 // pred_check_branch
      %26 = sbr.rel (0) target = $region13
    $region12: #{tpu_custom_call.1} parent=1 // pred_region
      _
    $region13: #{tpu_custom_call.1} parent=1 // pred_fallthru
      _
    // Predicated region
    $region14: #{tpu_custom_call.1} parent=1 // pred_check
      _
    $region15: #{tpu_custom_call.1} parent=1 // pred_check_branch
      %28 = sbr.rel (0) target = $region17
    $region16: #{tpu_custom_call.1} parent=1 // pred_region
      %s30 = ssub.s32 8192, 8192
      %31 = vsyncadd [#allocation3], %s30
      %s32 = sshll.u32 [#allocation2], 4
      %s33 = int_to_ptr.vmem [resolvable:$true] %s32
      %38 = dma.hbm_to_vmem [thread:$0]  %s3, 8192, %s33, [#allocation3], 256, 256, 16
    $region17: #{tpu_custom_call.1} parent=1 // pred_fallthru
      _
    // Predicated region
    $region18: #{tpu_custom_call.1} parent=1 // pred_check
      _
    $region19: #{tpu_custom_call.1} parent=1 // pred_check_branch
      %40 = sbr.rel (0) target = $region21
    $region20: #{tpu_custom_call.1} parent=1 // pred_region
      _
    $region21: #{tpu_custom_call.1} parent=1 // pred_fallthru
      _
    // Predicated region
    $region22: #{tpu_custom_call.1} parent=1 // pred_check
      _
    $region23: #{tpu_custom_call.1} parent=1 // pred_check_branch
      %42 = sbr.rel (0) target = $region25
    $region24: #{tpu_custom_call.1} parent=1 // pred_region
      %s44 = ssub.s32 8192, 8192
      %45 = vsyncadd [#allocation6], %s44
      %s46 = sshll.u32 [#allocation5], 4
      %s47 = int_to_ptr.vmem [resolvable:$true] %s46
      %52 = dma.hbm_to_vmem [thread:$0]  %s5, 8192, %s47, [#allocation6], 128, 128, 8
    $region25: #{tpu_custom_call.1} parent=1 // pred_fallthru
      _
    // Predicated region
    $region26: #{tpu_custom_call.1} parent=1 // pred_check
      _
    $region27: #{tpu_custom_call.1} parent=1 // pred_check_branch
      %54 = sbr.rel (0) target = $region29
    $region28: #{tpu_custom_call.1} parent=1 // pred_region
      _
    $region29: #{tpu_custom_call.1} parent=1 // pred_fallthru
      _
    // Predicated region
    $region30: #{tpu_custom_call.1} parent=1 // pred_check
      _
    $region31: #{tpu_custom_call.1} parent=1 // pred_check_branch
      %56 = sbr.rel (0) target = $region33
    $region32: #{tpu_custom_call.1} parent=1 // pred_region
      _
    $region33: #{tpu_custom_call.1} parent=1 // pred_fallthru
      _
    // Predicated region
    $region34: #{tpu_custom_call.1} parent=1 // pred_check
      _
    $region35: #{tpu_custom_call.1} parent=1 // pred_check_branch
      %58 = sbr.rel (0) target = $region37
    $region36: #{tpu_custom_call.1} parent=1 // pred_region
      _
    $region37: #{tpu_custom_call.1} parent=1 // pred_fallthru
      _
    // Predicated region
    $region38: #{tpu_custom_call.1} parent=1 // pred_check
      _
    $region39: #{tpu_custom_call.1} parent=1 // pred_check_branch
      %60 = sbr.rel (0) target = $region41
    $region40: #{tpu_custom_call.1} parent=1 // pred_region
      _
    $region41: #{tpu_custom_call.1} parent=1 // pred_fallthru
      _
    // Predicated region
    $region42: #{tpu_custom_call.1} parent=1 // pred_check
      _
    $region43: #{tpu_custom_call.1} parent=1 // pred_check_branch
      %62 = sbr.rel (0) target = $region45
    $region44: #{tpu_custom_call.1} parent=1 // pred_region
      _
    $region45: #{tpu_custom_call.1} parent=1 // pred_fallthru
      _
    // Predicated region
    $region46: #{tpu_custom_call.1} parent=1 // pred_check
      _
    $region47: #{tpu_custom_call.1} parent=1 // pred_check_branch
      %64 = sbr.rel (0) target = $region49
    $region48: #{tpu_custom_call.1} parent=1 // pred_region
      _
    $region49: #{tpu_custom_call.1} parent=1 // pred_fallthru
      _
    // Predicated region
    $region50: #{tpu_custom_call.1} parent=1 // pred_check
      _
    $region51: #{tpu_custom_call.1} parent=1 // pred_check_branch
      %66 = sbr.rel (0) target = $region53
    $region52: #{tpu_custom_call.1} parent=1 // pred_region
      _
    $region53: #{tpu_custom_call.1} parent=1 // pred_fallthru
      _
    // Predicated region
    $region54: #{tpu_custom_call.1} parent=1 // pred_check
      _
    $region55: #{tpu_custom_call.1} parent=1 // pred_check_branch
      %68 = sbr.rel (0) target = $region57
    $region56: #{tpu_custom_call.1} parent=1 // pred_region
      %69 = dma.done [#allocation3], 8192
    $region57: #{tpu_custom_call.1} parent=1 // pred_fallthru
      _
    // Predicated region
    $region58: #{tpu_custom_call.1} parent=1 // pred_check
      _
    $region59: #{tpu_custom_call.1} parent=1 // pred_check_branch
      %71 = sbr.rel (0) target = $region61
    $region60: #{tpu_custom_call.1} parent=1 // pred_region
      %72 = dma.done [#allocation6], 8192
    $region61: #{tpu_custom_call.1} parent=1 // pred_fallthru
      _
    %v74 = vld [vmem:[%s0] sm:$0xff]
    %v75 = vld [vmem:[%s0 + $0x8] sm:$0xff]
    %v76 = vpack.c.bf16 %v75, %v74
    %v77 = vld [vmem:[%s1] sm:$0xff]
    %v78 = vld [vmem:[%s1 + $0x8] sm:$0xff]
    %v79 = vld [vmem:[%s1 + $0x10] sm:$0xff]
    %v80 = vld [vmem:[%s1 + $0x18] sm:$0xff]
    %v81 = vld [vmem:[%s2] sm:$0x3]
    %v83 = vlaneseq
    %v84 = vshrl.u32 %v83, 7
    %v85 = vsub.s32 0, %v84
    %v86 = vrot.slane %v81, %v85
    %v87 = vlaneseq
    %v88 = vshrl.u32 %v87, 7
    %v89 = vsub.s32 1, %v88
    %v90 = vrot.slane %v81, %v89
    %v97 = vunpack.c.l.b16 %v77
    %v98 = vunpack.c.h.b16 %v77
    %v99 = vunpack.c.l.b16 %v78
    %v100 = vunpack.c.h.b16 %v78
    %v101 = vunpack.c.l.b16 %v79
    %v102 = vunpack.c.h.b16 %v79
    %v103 = vunpack.c.l.b16 %v80
    %v104 = vunpack.c.h.b16 %v80
    %v105 = vpack.c.b16 %v99, %v97
    %v106 = vpack.c.b16 %v100, %v98
    %v107 = vpack.c.b16 %v103, %v101
    %v108 = vpack.c.b16 %v104, %v102
    %vm113 = vcmask 261120
    %v115 = vsel %vm113, %v76, 0
    %117 = vmatprep.subr.bf16.mxu0 %v106
    %118 = vmatpush1.bf16.msra.mxu0 %v105
    %119 = vmatprep.subr.bf16.mxu0 %v108
    %120 = vmatpush1.bf16.msra.mxu0 %v107
    %121 = vmatprep.subr.bf16.mxu0 0
    %122 = vmatpush1.bf16.msra.mxu0 0
    %123 = vmatprep.subr.bf16.mxu0 0
    %124 = vmatpush1.bf16.msra.mxu0 0
    %125 = vmatprep.subr.bf16.mxu0 0
    %126 = vmatpush1.bf16.msra.mxu0 0
    %127 = vmatprep.subr.bf16.mxu0 0
    %128 = vmatpush1.bf16.msra.mxu0 0
    %129 = vmatprep.subr.bf16.mxu0 0
    %130 = vmatpush1.bf16.msra.mxu0 0
    %131 = vmatprep.subr.bf16.mxu0 0
    %132 = vmatpush1.bf16.msra.mxu0 0
    %133 = vmatprep.subr.bf16.mxu0 0
    %134 = vmatpush1.bf16.msra.mxu0 0
    %135 = vmatprep.subr.bf16.mxu0 0
    %136 = vmatpush1.bf16.msra.mxu0 0
    %137 = vmatprep.subr.bf16.mxu0 0
    %138 = vmatpush1.bf16.msra.mxu0 0
    %139 = vmatprep.subr.bf16.mxu0 0
    %140 = vmatpush1.bf16.msra.mxu0 0
    %141 = vmatprep.subr.bf16.mxu0 0
    %142 = vmatpush1.bf16.msra.mxu0 0
    %143 = vmatprep.subr.bf16.mxu0 0
    %144 = vmatpush1.bf16.msra.mxu0 0
    %145 = vmatprep.subr.bf16.mxu0 0
    %146 = vmatpush1.bf16.msra.mxu0 0
    %147 = vmatprep.subr.bf16.mxu0 0
    %148 = vmatpush1.bf16.msra.mxu0 0
    %149 = vmatprep.mubr.bf16.mxu0 0
    %150 = vmatmul.mubr.bf16.gmra.mrb[0].mxu0 %v115
    %v151 = vpop.f32.mrb[0].mxu0
    %v152 = vadd.f32 %v86, %v151
    %v153 = vpop.f32.mrb[0].mxu0
    %v154 = vadd.f32 %v90, %v153
    %v155 = vpop.f32.mrb[0].mxu0
    %v156 = vadd.f32 %v86, %v155
    %v157 = vpop.f32.mrb[0].mxu0
    %v158 = vadd.f32 %v90, %v157
    %159 = vdwg.mxu0
    %v160 = vmax.f32 %v152, 0.0
    %v161 = vmax.f32 %v154, 0.0
    %v162 = vmax.f32 %v156, 0.0
    %v163 = vmax.f32 %v158, 0.0
    %v164 = vpack.c.bf16 %v162, %v160
    %v165 = vpack.c.bf16 %v163, %v161
    %v166 = vld [vmem:[#allocation2] sm:$0xff]
    %v167 = vld [vmem:[#allocation2 + $0x8] sm:$0xff]
    %v168 = vld [vmem:[#allocation2 + $0x10] sm:$0xff]
    %v169 = vld [vmem:[#allocation2 + $0x18] sm:$0xff]
    %v170 = vld [vmem:[#allocation2 + $0x20] sm:$0xff]
    %v171 = vld [vmem:[#allocation2 + $0x28] sm:$0xff]
    %v172 = vld [vmem:[#allocation2 + $0x30] sm:$0xff]
    %v173 = vld [vmem:[#allocation2 + $0x38] sm:$0xff]
    %v174 = vld [vmem:[#allocation2 + $0x40] sm:$0xff]
    %v175 = vld [vmem:[#allocation2 + $0x48] sm:$0xff]
    %v176 = vld [vmem:[#allocation2 + $0x50] sm:$0xff]
    %v177 = vld [vmem:[#allocation2 + $0x58] sm:$0xff]
    %v178 = vld [vmem:[#allocation2 + $0x60] sm:$0xff]
    %v179 = vld [vmem:[#allocation2 + $0x68] sm:$0xff]
    %v180 = vld [vmem:[#allocation2 + $0x70] sm:$0xff]
    %v181 = vld [vmem:[#allocation2 + $0x78] sm:$0xff]
    %v182 = vld [vmem:[#allocation2 + $0x80] sm:$0xff]
    %v183 = vld [vmem:[#allocation2 + $0x88] sm:$0xff]
    %v184 = vld [vmem:[#allocation2 + $0x90] sm:$0xff]
    %v185 = vld [vmem:[#allocation2 + $0x98] sm:$0xff]
    %v186 = vld [vmem:[#allocation2 + $0xa0] sm:$0xff]
    %v187 = vld [vmem:[#allocation2 + $0xa8] sm:$0xff]
    %v188 = vld [vmem:[#allocation2 + $0xb0] sm:$0xff]
    %v189 = vld [vmem:[#allocation2 + $0xb8] sm:$0xff]
    %v190 = vld [vmem:[#allocation2 + $0xc0] sm:$0xff]
    %v191 = vld [vmem:[#allocation2 + $0xc8] sm:$0xff]
    %v192 = vld [vmem:[#allocation2 + $0xd0] sm:$0xff]
    %v193 = vld [vmem:[#allocation2 + $0xd8] sm:$0xff]
    %v194 = vld [vmem:[#allocation2 + $0xe0] sm:$0xff]
    %v195 = vld [vmem:[#allocation2 + $0xe8] sm:$0xff]
    %v196 = vld [vmem:[#allocation2 + $0xf0] sm:$0xff]
    %v197 = vld [vmem:[#allocation2 + $0xf8] sm:$0xff]
    %v198 = vld [vmem:[#allocation2 + $0x100] sm:$0xff]
    %v199 = vld [vmem:[#allocation2 + $0x108] sm:$0xff]
    %v200 = vld [vmem:[#allocation2 + $0x110] sm:$0xff]
    %v201 = vld [vmem:[#allocation2 + $0x118] sm:$0xff]
    %v202 = vld [vmem:[#allocation2 + $0x120] sm:$0xff]
    %v203 = vld [vmem:[#allocation2 + $0x128] sm:$0xff]
    %v204 = vld [vmem:[#allocation2 + $0x130] sm:$0xff]
    %v205 = vld [vmem:[#allocation2 + $0x138] sm:$0xff]
    %v206 = vld [vmem:[#allocation2 + $0x140] sm:$0xff]
    %v207 = vld [vmem:[#allocation2 + $0x148] sm:$0xff]
    %v208 = vld [vmem:[#allocation2 + $0x150] sm:$0xff]
    %v209 = vld [vmem:[#allocation2 + $0x158] sm:$0xff]
    %v210 = vld [vmem:[#allocation2 + $0x160] sm:$0xff]
    %v211 = vld [vmem:[#allocation2 + $0x168] sm:$0xff]
    %v212 = vld [vmem:[#allocation2 + $0x170] sm:$0xff]
    %v213 = vld [vmem:[#allocation2 + $0x178] sm:$0xff]
    %v214 = vld [vmem:[#allocation2 + $0x180] sm:$0xff]
    %v215 = vld [vmem:[#allocation2 + $0x188] sm:$0xff]
    %v216 = vld [vmem:[#allocation2 + $0x190] sm:$0xff]
    %v217 = vld [vmem:[#allocation2 + $0x198] sm:$0xff]
    %v218 = vld [vmem:[#allocation2 + $0x1a0] sm:$0xff]
    %v219 = vld [vmem:[#allocation2 + $0x1a8] sm:$0xff]
    %v220 = vld [vmem:[#allocation2 + $0x1b0] sm:$0xff]
    %v221 = vld [vmem:[#allocation2 + $0x1b8] sm:$0xff]
    %v222 = vld [vmem:[#allocation2 + $0x1c0] sm:$0xff]
    %v223 = vld [vmem:[#allocation2 + $0x1c8] sm:$0xff]
    %v224 = vld [vmem:[#allocation2 + $0x1d0] sm:$0xff]
    %v225 = vld [vmem:[#allocation2 + $0x1d8] sm:$0xff]
    %v226 = vld [vmem:[#allocation2 + $0x1e0] sm:$0xff]
    %v227 = vld [vmem:[#allocation2 + $0x1e8] sm:$0xff]
    %v228 = vld [vmem:[#allocation2 + $0x1f0] sm:$0xff]
    %v229 = vld [vmem:[#allocation2 + $0x1f8] sm:$0xff]
    %v230 = vld [vmem:[%s4] sm:$0xf]
    %v232 = vlaneseq
    %v233 = vshrl.u32 %v232, 7
    %v234 = vsub.s32 0, %v233
    %v235 = vrot.slane %v230, %v234
    %v236 = vlaneseq
    %v237 = vshrl.u32 %v236, 7
    %v238 = vsub.s32 1, %v237
    %v239 = vrot.slane %v230, %v238
    %v240 = vlaneseq
    %v241 = vshrl.u32 %v240, 7
    %v242 = vsub.s32 2, %v241
    %v243 = vrot.slane %v230, %v242
    %v244 = vlaneseq
    %v245 = vshrl.u32 %v244, 7
    %v246 = vsub.s32 3, %v245
    %v247 = vrot.slane %v230, %v246
    %v316 = vunpack.c.l.b16 %v166
    %v317 = vunpack.c.h.b16 %v166
    %v318 = vunpack.c.l.b16 %v167
    %v319 = vunpack.c.h.b16 %v167
    %v320 = vunpack.c.l.b16 %v168
    %v321 = vunpack.c.h.b16 %v168
    %v322 = vunpack.c.l.b16 %v169
    %v323 = vunpack.c.h.b16 %v169
    %v324 = vunpack.c.l.b16 %v170
    %v325 = vunpack.c.h.b16 %v170
    %v326 = vunpack.c.l.b16 %v171
    %v327 = vunpack.c.h.b16 %v171
    %v328 = vunpack.c.l.b16 %v172
    %v329 = vunpack.c.h.b16 %v172
    %v330 = vunpack.c.l.b16 %v173
    %v331 = vunpack.c.h.b16 %v173
    %v332 = vunpack.c.l.b16 %v174
    %v333 = vunpack.c.h.b16 %v174
    %v334 = vunpack.c.l.b16 %v175
    %v335 = vunpack.c.h.b16 %v175
    %v336 = vunpack.c.l.b16 %v176
    %v337 = vunpack.c.h.b16 %v176
    %v338 = vunpack.c.l.b16 %v177
    %v339 = vunpack.c.h.b16 %v177
    %v340 = vunpack.c.l.b16 %v178
    %v341 = vunpack.c.h.b16 %v178
    %v342 = vunpack.c.l.b16 %v179
    %v343 = vunpack.c.h.b16 %v179
    %v344 = vunpack.c.l.b16 %v180
    %v345 = vunpack.c.h.b16 %v180
    %v346 = vunpack.c.l.b16 %v181
    %v347 = vunpack.c.h.b16 %v181
    %v348 = vunpack.c.l.b16 %v182
    %v349 = vunpack.c.h.b16 %v182
    %v350 = vunpack.c.l.b16 %v183
    %v351 = vunpack.c.h.b16 %v183
    %v352 = vunpack.c.l.b16 %v184
    %v353 = vunpack.c.h.b16 %v184
    %v354 = vunpack.c.l.b16 %v185
    %v355 = vunpack.c.h.b16 %v185
    %v356 = vunpack.c.l.b16 %v186
    %v357 = vunpack.c.h.b16 %v186
    %v358 = vunpack.c.l.b16 %v187
    %v359 = vunpack.c.h.b16 %v187
    %v360 = vunpack.c.l.b16 %v188
    %v361 = vunpack.c.h.b16 %v188
    %v362 = vunpack.c.l.b16 %v189
    %v363 = vunpack.c.h.b16 %v189
    %v364 = vunpack.c.l.b16 %v190
    %v365 = vunpack.c.h.b16 %v190
    %v366 = vunpack.c.l.b16 %v191
    %v367 = vunpack.c.h.b16 %v191
    %v368 = vunpack.c.l.b16 %v192
    %v369 = vunpack.c.h.b16 %v192
    %v370 = vunpack.c.l.b16 %v193
    %v371 = vunpack.c.h.b16 %v193
    %v372 = vunpack.c.l.b16 %v194
    %v373 = vunpack.c.h.b16 %v194
    %v374 = vunpack.c.l.b16 %v195
    %v375 = vunpack.c.h.b16 %v195
    %v376 = vunpack.c.l.b16 %v196
    %v377 = vunpack.c.h.b16 %v196
    %v378 = vunpack.c.l.b16 %v197
    %v379 = vunpack.c.h.b16 %v197
    %v380 = vunpack.c.l.b16 %v198
    %v381 = vunpack.c.h.b16 %v198
    %v382 = vunpack.c.l.b16 %v199
    %v383 = vunpack.c.h.b16 %v199
    %v384 = vunpack.c.l.b16 %v200
    %v385 = vunpack.c.h.b16 %v200
    %v386 = vunpack.c.l.b16 %v201
    %v387 = vunpack.c.h.b16 %v201
    %v388 = vunpack.c.l.b16 %v202
    %v389 = vunpack.c.h.b16 %v202
    %v390 = vunpack.c.l.b16 %v203
    %v391 = vunpack.c.h.b16 %v203
    %v392 = vunpack.c.l.b16 %v204
    %v393 = vunpack.c.h.b16 %v204
    %v394 = vunpack.c.l.b16 %v205
    %v395 = vunpack.c.h.b16 %v205
    %v396 = vunpack.c.l.b16 %v206
    %v397 = vunpack.c.h.b16 %v206
    %v398 = vunpack.c.l.b16 %v207
    %v399 = vunpack.c.h.b16 %v207
    %v400 = vunpack.c.l.b16 %v208
    %v401 = vunpack.c.h.b16 %v208
    %v402 = vunpack.c.l.b16 %v209
    %v403 = vunpack.c.h.b16 %v209
    %v404 = vunpack.c.l.b16 %v210
    %v405 = vunpack.c.h.b16 %v210
    %v406 = vunpack.c.l.b16 %v211
    %v407 = vunpack.c.h.b16 %v211
    %v408 = vunpack.c.l.b16 %v212
    %v409 = vunpack.c.h.b16 %v212
    %v410 = vunpack.c.l.b16 %v213
    %v411 = vunpack.c.h.b16 %v213
    %v412 = vunpack.c.l.b16 %v214
    %v413 = vunpack.c.h.b16 %v214
    %v414 = vunpack.c.l.b16 %v215
    %v415 = vunpack.c.h.b16 %v215
    %v416 = vunpack.c.l.b16 %v216
    %v417 = vunpack.c.h.b16 %v216
    %v418 = vunpack.c.l.b16 %v217
    %v419 = vunpack.c.h.b16 %v217
    %v420 = vunpack.c.l.b16 %v218
    %v421 = vunpack.c.h.b16 %v218
    %v422 = vunpack.c.l.b16 %v219
    %v423 = vunpack.c.h.b16 %v219
    %v424 = vunpack.c.l.b16 %v220
    %v425 = vunpack.c.h.b16 %v220
    %v426 = vunpack.c.l.b16 %v221
    %v427 = vunpack.c.h.b16 %v221
    %v428 = vunpack.c.l.b16 %v222
    %v429 = vunpack.c.h.b16 %v222
    %v430 = vunpack.c.l.b16 %v223
    %v431 = vunpack.c.h.b16 %v223
    %v432 = vunpack.c.l.b16 %v224
    %v433 = vunpack.c.h.b16 %v224
    %v434 = vunpack.c.l.b16 %v225
    %v435 = vunpack.c.h.b16 %v225
    %v436 = vunpack.c.l.b16 %v226
    %v437 = vunpack.c.h.b16 %v226
    %v438 = vunpack.c.l.b16 %v227
    %v439 = vunpack.c.h.b16 %v227
    %v440 = vunpack.c.l.b16 %v228
    %v441 = vunpack.c.h.b16 %v228
    %v442 = vunpack.c.l.b16 %v229
    %v443 = vunpack.c.h.b16 %v229
    %v444 = vpack.c.b16 %v320, %v316
    %v445 = vpack.c.b16 %v321, %v317
    %v446 = vpack.c.b16 %v322, %v318
    %v447 = vpack.c.b16 %v323, %v319
    %v448 = vpack.c.b16 %v328, %v324
    %v449 = vpack.c.b16 %v329, %v325
    %v450 = vpack.c.b16 %v330, %v326
    %v451 = vpack.c.b16 %v331, %v327
    %v452 = vpack.c.b16 %v336, %v332
    %v453 = vpack.c.b16 %v337, %v333
    %v454 = vpack.c.b16 %v338, %v334
    %v455 = vpack.c.b16 %v339, %v335
    %v456 = vpack.c.b16 %v344, %v340
    %v457 = vpack.c.b16 %v345, %v341
    %v458 = vpack.c.b16 %v346, %v342
    %v459 = vpack.c.b16 %v347, %v343
    %v460 = vpack.c.b16 %v352, %v348
    %v461 = vpack.c.b16 %v353, %v349
    %v462 = vpack.c.b16 %v354, %v350
    %v463 = vpack.c.b16 %v355, %v351
    %v464 = vpack.c.b16 %v360, %v356
    %v465 = vpack.c.b16 %v361, %v357
    %v466 = vpack.c.b16 %v362, %v358
    %v467 = vpack.c.b16 %v363, %v359
    %v468 = vpack.c.b16 %v368, %v364
    %v469 = vpack.c.b16 %v369, %v365
    %v470 = vpack.c.b16 %v370, %v366
    %v471 = vpack.c.b16 %v371, %v367
    %v472 = vpack.c.b16 %v376, %v372
    %v473 = vpack.c.b16 %v377, %v373
    %v474 = vpack.c.b16 %v378, %v374
    %v475 = vpack.c.b16 %v379, %v375
    %v476 = vpack.c.b16 %v384, %v380
    %v477 = vpack.c.b16 %v385, %v381
    %v478 = vpack.c.b16 %v386, %v382
    %v479 = vpack.c.b16 %v387, %v383
    %v480 = vpack.c.b16 %v392, %v388
    %v481 = vpack.c.b16 %v393, %v389
    %v482 = vpack.c.b16 %v394, %v390
    %v483 = vpack.c.b16 %v395, %v391
    %v484 = vpack.c.b16 %v400, %v396
    %v485 = vpack.c.b16 %v401, %v397
    %v486 = vpack.c.b16 %v402, %v398
    %v487 = vpack.c.b16 %v403, %v399
    %v488 = vpack.c.b16 %v408, %v404
    %v489 = vpack.c.b16 %v409, %v405
    %v490 = vpack.c.b16 %v410, %v406
    %v491 = vpack.c.b16 %v411, %v407
    %v492 = vpack.c.b16 %v416, %v412
    %v493 = vpack.c.b16 %v417, %v413
    %v494 = vpack.c.b16 %v418, %v414
    %v495 = vpack.c.b16 %v419, %v415
    %v496 = vpack.c.b16 %v424, %v420
    %v497 = vpack.c.b16 %v425, %v421
    %v498 = vpack.c.b16 %v426, %v422
    %v499 = vpack.c.b16 %v427, %v423
    %v500 = vpack.c.b16 %v432, %v428
    %v501 = vpack.c.b16 %v433, %v429
    %v502 = vpack.c.b16 %v434, %v430
    %v503 = vpack.c.b16 %v435, %v431
    %v504 = vpack.c.b16 %v440, %v436
    %v505 = vpack.c.b16 %v441, %v437
    %v506 = vpack.c.b16 %v442, %v438
    %v507 = vpack.c.b16 %v443, %v439
    %572 = vmatprep.subr.bf16.mxu0 %v445
    %573 = vmatpush1.bf16.msra.mxu0 %v444
    %574 = vmatprep.subr.bf16.mxu0 %v449
    %575 = vmatpush1.bf16.msra.mxu0 %v448
    %576 = vmatprep.subr.bf16.mxu0 %v453
    %577 = vmatpush1.bf16.msra.mxu0 %v452
    %578 = vmatprep.subr.bf16.mxu0 %v457
    %579 = vmatpush1.bf16.msra.mxu0 %v456
    %580 = vmatprep.subr.bf16.mxu0 %v461
    %581 = vmatpush1.bf16.msra.mxu0 %v460
    %582 = vmatprep.subr.bf16.mxu0 %v465
    %583 = vmatpush1.bf16.msra.mxu0 %v464
    %584 = vmatprep.subr.bf16.mxu0 %v469
    %585 = vmatpush1.bf16.msra.mxu0 %v468
    %586 = vmatprep.subr.bf16.mxu0 %v473
    %587 = vmatpush1.bf16.msra.mxu0 %v472
    %588 = vmatprep.subr.bf16.mxu0 %v477
    %589 = vmatpush1.bf16.msra.mxu0 %v476
    %590 = vmatprep.subr.bf16.mxu0 %v481
    %591 = vmatpush1.bf16.msra.mxu0 %v480
    %592 = vmatprep.subr.bf16.mxu0 %v485
    %593 = vmatpush1.bf16.msra.mxu0 %v484
    %594 = vmatprep.subr.bf16.mxu0 %v489
    %595 = vmatpush1.bf16.msra.mxu0 %v488
    %596 = vmatprep.subr.bf16.mxu0 %v493
    %597 = vmatpush1.bf16.msra.mxu0 %v492
    %598 = vmatprep.subr.bf16.mxu0 %v497
    %599 = vmatpush1.bf16.msra.mxu0 %v496
    %600 = vmatprep.subr.bf16.mxu0 %v501
    %601 = vmatpush1.bf16.msra.mxu0 %v500
    %602 = vmatprep.subr.bf16.mxu0 %v505
    %603 = vmatpush1.bf16.msra.mxu0 %v504
    %604 = vmatprep.mubr.bf16.mxu0 %v165
    %605 = vmatmul.mubr.bf16.gmra.mrb[0].mxu0 %v164
    %v606 = vpop.f32.mrb[0].mxu0
    %v607 = vadd.f32 %v235, %v606
    %v608 = vpop.f32.mrb[0].mxu0
    %v609 = vadd.f32 %v239, %v608
    %v610 = vpop.f32.mrb[0].mxu0
    %v611 = vadd.f32 %v235, %v610
    %v612 = vpop.f32.mrb[0].mxu0
    %v613 = vadd.f32 %v239, %v612
    %614 = vdwg.mxu0
    %615 = vmatprep.subr.bf16.mxu0 %v447
    %616 = vmatpush1.bf16.msra.mxu0 %v446
    %617 = vmatprep.subr.bf16.mxu0 %v451
    %618 = vmatpush1.bf16.msra.mxu0 %v450
    %619 = vmatprep.subr.bf16.mxu0 %v455
    %620 = vmatpush1.bf16.msra.mxu0 %v454
    %621 = vmatprep.subr.bf16.mxu0 %v459
    %622 = vmatpush1.bf16.msra.mxu0 %v458
    %623 = vmatprep.subr.bf16.mxu0 %v463
    %624 = vmatpush1.bf16.msra.mxu0 %v462
    %625 = vmatprep.subr.bf16.mxu0 %v467
    %626 = vmatpush1.bf16.msra.mxu0 %v466
    %627 = vmatprep.subr.bf16.mxu0 %v471
    %628 = vmatpush1.bf16.msra.mxu0 %v470
    %629 = vmatprep.subr.bf16.mxu0 %v475
    %630 = vmatpush1.bf16.msra.mxu0 %v474
    %631 = vmatprep.subr.bf16.mxu0 %v479
    %632 = vmatpush1.bf16.msra.mxu0 %v478
    %633 = vmatprep.subr.bf16.mxu0 %v483
    %634 = vmatpush1.bf16.msra.mxu0 %v482
    %635 = vmatprep.subr.bf16.mxu0 %v487
    %636 = vmatpush1.bf16.msra.mxu0 %v486
    %637 = vmatprep.subr.bf16.mxu0 %v491
    %638 = vmatpush1.bf16.msra.mxu0 %v490
    %639 = vmatprep.subr.bf16.mxu0 %v495
    %640 = vmatpush1.bf16.msra.mxu0 %v494
    %641 = vmatprep.subr.bf16.mxu0 %v499
    %642 = vmatpush1.bf16.msra.mxu0 %v498
    %643 = vmatprep.subr.bf16.mxu0 %v503
    %644 = vmatpush1.bf16.msra.mxu0 %v502
    %645 = vmatprep.subr.bf16.mxu0 %v507
    %646 = vmatpush1.bf16.msra.mxu0 %v506
    %647 = vmatprep.mubr.bf16.mxu0 %v165
    %648 = vmatmul.mubr.bf16.gmra.mrb[0].mxu0 %v164
    %v649 = vpop.f32.mrb[0].mxu0
    %v650 = vadd.f32 %v243, %v649
    %v651 = vpop.f32.mrb[0].mxu0
    %v652 = vadd.f32 %v247, %v651
    %v653 = vpop.f32.mrb[0].mxu0
    %v654 = vadd.f32 %v243, %v653
    %v655 = vpop.f32.mrb[0].mxu0
    %v656 = vadd.f32 %v247, %v655
    %657 = vdwg.mxu0
    %v658 = vmax.f32 %v607, 0.0
    %v659 = vmax.f32 %v609, 0.0
    %v660 = vmax.f32 %v650, 0.0
    %v661 = vmax.f32 %v652, 0.0
    %v662 = vmax.f32 %v611, 0.0
    %v663 = vmax.f32 %v613, 0.0
    %v664 = vmax.f32 %v654, 0.0
    %v665 = vmax.f32 %v656, 0.0
    %v666 = vpack.c.bf16 %v662, %v658
    %v667 = vpack.c.bf16 %v663, %v659
    %v668 = vpack.c.bf16 %v664, %v660
    %v669 = vpack.c.bf16 %v665, %v661
    %v670 = vld [vmem:[#allocation5] sm:$0xff]
    %v671 = vld [vmem:[#allocation5 + $0x8] sm:$0xff]
    %v672 = vld [vmem:[#allocation5 + $0x10] sm:$0xff]
    %v673 = vld [vmem:[#allocation5 + $0x18] sm:$0xff]
    %v674 = vld [vmem:[#allocation5 + $0x20] sm:$0xff]
    %v675 = vld [vmem:[#allocation5 + $0x28] sm:$0xff]
    %v676 = vld [vmem:[#allocation5 + $0x30] sm:$0xff]
    %v677 = vld [vmem:[#allocation5 + $0x38] sm:$0xff]
    %v678 = vld [vmem:[#allocation5 + $0x40] sm:$0xff]
    %v679 = vld [vmem:[#allocation5 + $0x48] sm:$0xff]
    %v680 = vld [vmem:[#allocation5 + $0x50] sm:$0xff]
    %v681 = vld [vmem:[#allocation5 + $0x58] sm:$0xff]
    %v682 = vld [vmem:[#allocation5 + $0x60] sm:$0xff]
    %v683 = vld [vmem:[#allocation5 + $0x68] sm:$0xff]
    %v684 = vld [vmem:[#allocation5 + $0x70] sm:$0xff]
    %v685 = vld [vmem:[#allocation5 + $0x78] sm:$0xff]
    %v686 = vld [vmem:[#allocation5 + $0x80] sm:$0xff]
    %v687 = vld [vmem:[#allocation5 + $0x88] sm:$0xff]
    %v688 = vld [vmem:[#allocation5 + $0x90] sm:$0xff]
    %v689 = vld [vmem:[#allocation5 + $0x98] sm:$0xff]
    %v690 = vld [vmem:[#allocation5 + $0xa0] sm:$0xff]
    %v691 = vld [vmem:[#allocation5 + $0xa8] sm:$0xff]
    %v692 = vld [vmem:[#allocation5 + $0xb0] sm:$0xff]
    %v693 = vld [vmem:[#allocation5 + $0xb8] sm:$0xff]
    %v694 = vld [vmem:[#allocation5 + $0xc0] sm:$0xff]
    %v695 = vld [vmem:[#allocation5 + $0xc8] sm:$0xff]
    %v696 = vld [vmem:[#allocation5 + $0xd0] sm:$0xff]
    %v697 = vld [vmem:[#allocation5 + $0xd8] sm:$0xff]
    %v698 = vld [vmem:[#allocation5 + $0xe0] sm:$0xff]
    %v699 = vld [vmem:[#allocation5 + $0xe8] sm:$0xff]
    %v700 = vld [vmem:[#allocation5 + $0xf0] sm:$0xff]
    %v701 = vld [vmem:[#allocation5 + $0xf8] sm:$0xff]
    %v702 = vld [vmem:[#allocation5 + $0x100] sm:$0xff]
    %v703 = vld [vmem:[#allocation5 + $0x108] sm:$0xff]
    %v704 = vld [vmem:[#allocation5 + $0x110] sm:$0xff]
    %v705 = vld [vmem:[#allocation5 + $0x118] sm:$0xff]
    %v706 = vld [vmem:[#allocation5 + $0x120] sm:$0xff]
    %v707 = vld [vmem:[#allocation5 + $0x128] sm:$0xff]
    %v708 = vld [vmem:[#allocation5 + $0x130] sm:$0xff]
    %v709 = vld [vmem:[#allocation5 + $0x138] sm:$0xff]
    %v710 = vld [vmem:[#allocation5 + $0x140] sm:$0xff]
    %v711 = vld [vmem:[#allocation5 + $0x148] sm:$0xff]
    %v712 = vld [vmem:[#allocation5 + $0x150] sm:$0xff]
    %v713 = vld [vmem:[#allocation5 + $0x158] sm:$0xff]
    %v714 = vld [vmem:[#allocation5 + $0x160] sm:$0xff]
    %v715 = vld [vmem:[#allocation5 + $0x168] sm:$0xff]
    %v716 = vld [vmem:[#allocation5 + $0x170] sm:$0xff]
    %v717 = vld [vmem:[#allocation5 + $0x178] sm:$0xff]
    %v718 = vld [vmem:[#allocation5 + $0x180] sm:$0xff]
    %v719 = vld [vmem:[#allocation5 + $0x188] sm:$0xff]
    %v720 = vld [vmem:[#allocation5 + $0x190] sm:$0xff]
    %v721 = vld [vmem:[#allocation5 + $0x198] sm:$0xff]
    %v722 = vld [vmem:[#allocation5 + $0x1a0] sm:$0xff]
    %v723 = vld [vmem:[#allocation5 + $0x1a8] sm:$0xff]
    %v724 = vld [vmem:[#allocation5 + $0x1b0] sm:$0xff]
    %v725 = vld [vmem:[#allocation5 + $0x1b8] sm:$0xff]
    %v726 = vld [vmem:[#allocation5 + $0x1c0] sm:$0xff]
    %v727 = vld [vmem:[#allocation5 + $0x1c8] sm:$0xff]
    %v728 = vld [vmem:[#allocation5 + $0x1d0] sm:$0xff]
    %v729 = vld [vmem:[#allocation5 + $0x1d8] sm:$0xff]
    %v730 = vld [vmem:[#allocation5 + $0x1e0] sm:$0xff]
    %v731 = vld [vmem:[#allocation5 + $0x1e8] sm:$0xff]
    %v732 = vld [vmem:[#allocation5 + $0x1f0] sm:$0xff]
    %v733 = vld [vmem:[#allocation5 + $0x1f8] sm:$0xff]
    %v734 = vld [vmem:[%s6] sm:$0x3]
    %v736 = vlaneseq
    %v737 = vshrl.u32 %v736, 7
    %v738 = vsub.s32 0, %v737
    %v739 = vrot.slane %v734, %v738
    %v740 = vlaneseq
    %v741 = vshrl.u32 %v740, 7
    %v742 = vsub.s32 1, %v741
    %v743 = vrot.slane %v734, %v742
    %v810 = vunpack.c.l.b16 %v670
    %v811 = vunpack.c.h.b16 %v670
    %v812 = vunpack.c.l.b16 %v671
    %v813 = vunpack.c.h.b16 %v671
    %v814 = vunpack.c.l.b16 %v672
    %v815 = vunpack.c.h.b16 %v672
    %v816 = vunpack.c.l.b16 %v673
    %v817 = vunpack.c.h.b16 %v673
    %v818 = vunpack.c.l.b16 %v674
    %v819 = vunpack.c.h.b16 %v674
    %v820 = vunpack.c.l.b16 %v675
    %v821 = vunpack.c.h.b16 %v675
    %v822 = vunpack.c.l.b16 %v676
    %v823 = vunpack.c.h.b16 %v676
    %v824 = vunpack.c.l.b16 %v677
    %v825 = vunpack.c.h.b16 %v677
    %v826 = vunpack.c.l.b16 %v678
    %v827 = vunpack.c.h.b16 %v678
    %v828 = vunpack.c.l.b16 %v679
    %v829 = vunpack.c.h.b16 %v679
    %v830 = vunpack.c.l.b16 %v680
    %v831 = vunpack.c.h.b16 %v680
    %v832 = vunpack.c.l.b16 %v681
    %v833 = vunpack.c.h.b16 %v681
    %v834 = vunpack.c.l.b16 %v682
    %v835 = vunpack.c.h.b16 %v682
    %v836 = vunpack.c.l.b16 %v683
    %v837 = vunpack.c.h.b16 %v683
    %v838 = vunpack.c.l.b16 %v684
    %v839 = vunpack.c.h.b16 %v684
    %v840 = vunpack.c.l.b16 %v685
    %v841 = vunpack.c.h.b16 %v685
    %v842 = vunpack.c.l.b16 %v686
    %v843 = vunpack.c.h.b16 %v686
    %v844 = vunpack.c.l.b16 %v687
    %v845 = vunpack.c.h.b16 %v687
    %v846 = vunpack.c.l.b16 %v688
    %v847 = vunpack.c.h.b16 %v688
    %v848 = vunpack.c.l.b16 %v689
    %v849 = vunpack.c.h.b16 %v689
    %v850 = vunpack.c.l.b16 %v690
    %v851 = vunpack.c.h.b16 %v690
    %v852 = vunpack.c.l.b16 %v691
    %v853 = vunpack.c.h.b16 %v691
    %v854 = vunpack.c.l.b16 %v692
    %v855 = vunpack.c.h.b16 %v692
    %v856 = vunpack.c.l.b16 %v693
    %v857 = vunpack.c.h.b16 %v693
    %v858 = vunpack.c.l.b16 %v694
    %v859 = vunpack.c.h.b16 %v694
    %v860 = vunpack.c.l.b16 %v695
    %v861 = vunpack.c.h.b16 %v695
    %v862 = vunpack.c.l.b16 %v696
    %v863 = vunpack.c.h.b16 %v696
    %v864 = vunpack.c.l.b16 %v697
    %v865 = vunpack.c.h.b16 %v697
    %v866 = vunpack.c.l.b16 %v698
    %v867 = vunpack.c.h.b16 %v698
    %v868 = vunpack.c.l.b16 %v699
    %v869 = vunpack.c.h.b16 %v699
    %v870 = vunpack.c.l.b16 %v700
    %v871 = vunpack.c.h.b16 %v700
    %v872 = vunpack.c.l.b16 %v701
    %v873 = vunpack.c.h.b16 %v701
    %v874 = vunpack.c.l.b16 %v702
    %v875 = vunpack.c.h.b16 %v702
    %v876 = vunpack.c.l.b16 %v703
    %v877 = vunpack.c.h.b16 %v703
    %v878 = vunpack.c.l.b16 %v704
    %v879 = vunpack.c.h.b16 %v704
    %v880 = vunpack.c.l.b16 %v705
    %v881 = vunpack.c.h.b16 %v705
    %v882 = vunpack.c.l.b16 %v706
    %v883 = vunpack.c.h.b16 %v706
    %v884 = vunpack.c.l.b16 %v707
    %v885 = vunpack.c.h.b16 %v707
    %v886 = vunpack.c.l.b16 %v708
    %v887 = vunpack.c.h.b16 %v708
    %v888 = vunpack.c.l.b16 %v709
    %v889 = vunpack.c.h.b16 %v709
    %v890 = vunpack.c.l.b16 %v710
    %v891 = vunpack.c.h.b16 %v710
    %v892 = vunpack.c.l.b16 %v711
    %v893 = vunpack.c.h.b16 %v711
    %v894 = vunpack.c.l.b16 %v712
    %v895 = vunpack.c.h.b16 %v712
    %v896 = vunpack.c.l.b16 %v713
    %v897 = vunpack.c.h.b16 %v713
    %v898 = vunpack.c.l.b16 %v714
    %v899 = vunpack.c.h.b16 %v714
    %v900 = vunpack.c.l.b16 %v715
    %v901 = vunpack.c.h.b16 %v715
    %v902 = vunpack.c.l.b16 %v716
    %v903 = vunpack.c.h.b16 %v716
    %v904 = vunpack.c.l.b16 %v717
    %v905 = vunpack.c.h.b16 %v717
    %v906 = vunpack.c.l.b16 %v718
    %v907 = vunpack.c.h.b16 %v718
    %v908 = vunpack.c.l.b16 %v719
    %v909 = vunpack.c.h.b16 %v719
    %v910 = vunpack.c.l.b16 %v720
    %v911 = vunpack.c.h.b16 %v720
    %v912 = vunpack.c.l.b16 %v721
    %v913 = vunpack.c.h.b16 %v721
    %v914 = vunpack.c.l.b16 %v722
    %v915 = vunpack.c.h.b16 %v722
    %v916 = vunpack.c.l.b16 %v723
    %v917 = vunpack.c.h.b16 %v723
    %v918 = vunpack.c.l.b16 %v724
    %v919 = vunpack.c.h.b16 %v724
    %v920 = vunpack.c.l.b16 %v725
    %v921 = vunpack.c.h.b16 %v725
    %v922 = vunpack.c.l.b16 %v726
    %v923 = vunpack.c.h.b16 %v726
    %v924 = vunpack.c.l.b16 %v727
    %v925 = vunpack.c.h.b16 %v727
    %v926 = vunpack.c.l.b16 %v728
    %v927 = vunpack.c.h.b16 %v728
    %v928 = vunpack.c.l.b16 %v729
    %v929 = vunpack.c.h.b16 %v729
    %v930 = vunpack.c.l.b16 %v730
    %v931 = vunpack.c.h.b16 %v730
    %v932 = vunpack.c.l.b16 %v731
    %v933 = vunpack.c.h.b16 %v731
    %v934 = vunpack.c.l.b16 %v732
    %v935 = vunpack.c.h.b16 %v732
    %v936 = vunpack.c.l.b16 %v733
    %v937 = vunpack.c.h.b16 %v733
    %v938 = vpack.c.b16 %v812, %v810
    %v939 = vpack.c.b16 %v813, %v811
    %v940 = vpack.c.b16 %v816, %v814
    %v941 = vpack.c.b16 %v817, %v815
    %v942 = vpack.c.b16 %v820, %v818
    %v943 = vpack.c.b16 %v821, %v819
    %v944 = vpack.c.b16 %v824, %v822
    %v945 = vpack.c.b16 %v825, %v823
    %v946 = vpack.c.b16 %v828, %v826
    %v947 = vpack.c.b16 %v829, %v827
    %v948 = vpack.c.b16 %v832, %v830
    %v949 = vpack.c.b16 %v833, %v831
    %v950 = vpack.c.b16 %v836, %v834
    %v951 = vpack.c.b16 %v837, %v835
    %v952 = vpack.c.b16 %v840, %v838
    %v953 = vpack.c.b16 %v841, %v839
    %v954 = vpack.c.b16 %v844, %v842
    %v955 = vpack.c.b16 %v845, %v843
    %v956 = vpack.c.b16 %v848, %v846
    %v957 = vpack.c.b16 %v849, %v847
    %v958 = vpack.c.b16 %v852, %v850
    %v959 = vpack.c.b16 %v853, %v851
    %v960 = vpack.c.b16 %v856, %v854
    %v961 = vpack.c.b16 %v857, %v855
    %v962 = vpack.c.b16 %v860, %v858
    %v963 = vpack.c.b16 %v861, %v859
    %v964 = vpack.c.b16 %v864, %v862
    %v965 = vpack.c.b16 %v865, %v863
    %v966 = vpack.c.b16 %v868, %v866
    %v967 = vpack.c.b16 %v869, %v867
    %v968 = vpack.c.b16 %v872, %v870
    %v969 = vpack.c.b16 %v873, %v871
    %v970 = vpack.c.b16 %v876, %v874
    %v971 = vpack.c.b16 %v877, %v875
    %v972 = vpack.c.b16 %v880, %v878
    %v973 = vpack.c.b16 %v881, %v879
    %v974 = vpack.c.b16 %v884, %v882
    %v975 = vpack.c.b16 %v885, %v883
    %v976 = vpack.c.b16 %v888, %v886
    %v977 = vpack.c.b16 %v889, %v887
    %v978 = vpack.c.b16 %v892, %v890
    %v979 = vpack.c.b16 %v893, %v891
    %v980 = vpack.c.b16 %v896, %v894
    %v981 = vpack.c.b16 %v897, %v895
    %v982 = vpack.c.b16 %v900, %v898
    %v983 = vpack.c.b16 %v901, %v899
    %v984 = vpack.c.b16 %v904, %v902
    %v985 = vpack.c.b16 %v905, %v903
    %v986 = vpack.c.b16 %v908, %v906
    %v987 = vpack.c.b16 %v909, %v907
    %v988 = vpack.c.b16 %v912, %v910
    %v989 = vpack.c.b16 %v913, %v911
    %v990 = vpack.c.b16 %v916, %v914
    %v991 = vpack.c.b16 %v917, %v915
    %v992 = vpack.c.b16 %v920, %v918
    %v993 = vpack.c.b16 %v921, %v919
    %v994 = vpack.c.b16 %v924, %v922
    %v995 = vpack.c.b16 %v925, %v923
    %v996 = vpack.c.b16 %v928, %v926
    %v997 = vpack.c.b16 %v929, %v927
    %v998 = vpack.c.b16 %v932, %v930
    %v999 = vpack.c.b16 %v933, %v931
    %v1000 = vpack.c.b16 %v936, %v934
    %v1001 = vpack.c.b16 %v937, %v935
    %1066 = vmatprep.subr.bf16.mxu0 %v939
    %1067 = vmatpush1.bf16.msra.mxu0 %v938
    %1068 = vmatprep.subr.bf16.mxu0 %v941
    %1069 = vmatpush1.bf16.msra.mxu0 %v940
    %1070 = vmatprep.subr.bf16.mxu0 %v943
    %1071 = vmatpush1.bf16.msra.mxu0 %v942
    %1072 = vmatprep.subr.bf16.mxu0 %v945
    %1073 = vmatpush1.bf16.msra.mxu0 %v944
    %1074 = vmatprep.subr.bf16.mxu0 %v947
    %1075 = vmatpush1.bf16.msra.mxu0 %v946
    %1076 = vmatprep.subr.bf16.mxu0 %v949
    %1077 = vmatpush1.bf16.msra.mxu0 %v948
    %1078 = vmatprep.subr.bf16.mxu0 %v951
    %1079 = vmatpush1.bf16.msra.mxu0 %v950
    %1080 = vmatprep.subr.bf16.mxu0 %v953
    %1081 = vmatpush1.bf16.msra.mxu0 %v952
    %1082 = vmatprep.subr.bf16.mxu0 %v955
    %1083 = vmatpush1.bf16.msra.mxu0 %v954
    %1084 = vmatprep.subr.bf16.mxu0 %v957
    %1085 = vmatpush1.bf16.msra.mxu0 %v956
    %1086 = vmatprep.subr.bf16.mxu0 %v959
    %1087 = vmatpush1.bf16.msra.mxu0 %v958
    %1088 = vmatprep.subr.bf16.mxu0 %v961
    %1089 = vmatpush1.bf16.msra.mxu0 %v960
    %1090 = vmatprep.subr.bf16.mxu0 %v963
    %1091 = vmatpush1.bf16.msra.mxu0 %v962
    %1092 = vmatprep.subr.bf16.mxu0 %v965
    %1093 = vmatpush1.bf16.msra.mxu0 %v964
    %1094 = vmatprep.subr.bf16.mxu0 %v967
    %1095 = vmatpush1.bf16.msra.mxu0 %v966
    %1096 = vmatprep.subr.bf16.mxu0 %v969
    %1097 = vmatpush1.bf16.msra.mxu0 %v968
    %1098 = vmatprep.mubr.bf16.mxu0 %v667
    %1099 = vmatmul.mubr.bf16.gmra.mrb[0].mxu0 %v666
    %v1100 = vpop.f32.mrb[0].mxu0
    %v1101 = vadd.f32 %v739, %v1100
    %v1102 = vpop.f32.mrb[0].mxu0
    %v1103 = vadd.f32 %v743, %v1102
    %v1104 = vpop.f32.mrb[0].mxu0
    %v1105 = vadd.f32 %v739, %v1104
    %v1106 = vpop.f32.mrb[0].mxu0
    %v1107 = vadd.f32 %v743, %v1106
    %1108 = vdwg.mxu0
    %1109 = vmatprep.subr.bf16.mxu0 %v971
    %1110 = vmatpush1.bf16.msra.mxu0 %v970
    %1111 = vmatprep.subr.bf16.mxu0 %v973
    %1112 = vmatpush1.bf16.msra.mxu0 %v972
    %1113 = vmatprep.subr.bf16.mxu0 %v975
    %1114 = vmatpush1.bf16.msra.mxu0 %v974
    %1115 = vmatprep.subr.bf16.mxu0 %v977
    %1116 = vmatpush1.bf16.msra.mxu0 %v976
    %1117 = vmatprep.subr.bf16.mxu0 %v979
    %1118 = vmatpush1.bf16.msra.mxu0 %v978
    %1119 = vmatprep.subr.bf16.mxu0 %v981
    %1120 = vmatpush1.bf16.msra.mxu0 %v980
    %1121 = vmatprep.subr.bf16.mxu0 %v983
    %1122 = vmatpush1.bf16.msra.mxu0 %v982
    %1123 = vmatprep.subr.bf16.mxu0 %v985
    %1124 = vmatpush1.bf16.msra.mxu0 %v984
    %1125 = vmatprep.subr.bf16.mxu0 %v987
    %1126 = vmatpush1.bf16.msra.mxu0 %v986
    %1127 = vmatprep.subr.bf16.mxu0 %v989
    %1128 = vmatpush1.bf16.msra.mxu0 %v988
    %1129 = vmatprep.subr.bf16.mxu0 %v991
    %1130 = vmatpush1.bf16.msra.mxu0 %v990
    %1131 = vmatprep.subr.bf16.mxu0 %v993
    %1132 = vmatpush1.bf16.msra.mxu0 %v992
    %1133 = vmatprep.subr.bf16.mxu0 %v995
    %1134 = vmatpush1.bf16.msra.mxu0 %v994
    %1135 = vmatprep.subr.bf16.mxu0 %v997
    %1136 = vmatpush1.bf16.msra.mxu0 %v996
    %1137 = vmatprep.subr.bf16.mxu0 %v999
    %1138 = vmatpush1.bf16.msra.mxu0 %v998
    %1139 = vmatprep.subr.bf16.mxu0 %v1001
    %1140 = vmatpush1.bf16.msra.mxu0 %v1000
    %1141 = vmatprep.mubr.bf16.mxu0 %v669
    %1142 = vmatmul.mubr.bf16.gmra.mrb[0].mxu0 %v668
    %v1143 = vpop.f32.mrb[0].mxu0
    %v1144 = vadd.f32 %v1101, %v1143
    %v1145 = vpop.f32.mrb[0].mxu0
    %v1146 = vadd.f32 %v1103, %v1145
    %v1147 = vpop.f32.mrb[0].mxu0
    %v1148 = vadd.f32 %v1105, %v1147
    %v1149 = vpop.f32.mrb[0].mxu0
    %v1150 = vadd.f32 %v1107, %v1149
    %1151 = vdwg.mxu0
    %v1152 = vmax.f32 %v1144, 0.0
    %v1153 = vmax.f32 %v1146, 0.0
    %v1154 = vmax.f32 %v1148, 0.0
    %v1155 = vmax.f32 %v1150, 0.0
    %v1156 = vpack.c.bf16 %v1154, %v1152
    %v1157 = vpack.c.bf16 %v1155, %v1153
    %v1158 = vld [vmem:[%s7] sm:$0xf]
    %v1159 = vld [vmem:[%s7 + $0x4] sm:$0xf]
    %v1160 = vld [vmem:[%s7 + $0x8] sm:$0xf]
    %v1161 = vld [vmem:[%s7 + $0xc] sm:$0xf]
    %v1162 = vld [vmem:[%s7 + $0x10] sm:$0xf]
    %v1163 = vld [vmem:[%s7 + $0x14] sm:$0xf]
    %v1164 = vld [vmem:[%s7 + $0x18] sm:$0xf]
    %v1165 = vld [vmem:[%s7 + $0x1c] sm:$0xf]
    %v1166 = vld [vmem:[%s7 + $0x20] sm:$0xf]
    %v1167 = vld [vmem:[%s7 + $0x24] sm:$0xf]
    %v1168 = vld [vmem:[%s7 + $0x28] sm:$0xf]
    %v1169 = vld [vmem:[%s7 + $0x2c] sm:$0xf]
    %v1170 = vld [vmem:[%s7 + $0x30] sm:$0xf]
    %v1171 = vld [vmem:[%s7 + $0x34] sm:$0xf]
    %v1172 = vld [vmem:[%s7 + $0x38] sm:$0xf]
    %v1173 = vld [vmem:[%s7 + $0x3c] sm:$0xf]
    %v1174 = vld [vmem:[%s7 + $0x40] sm:$0xf]
    %v1175 = vld [vmem:[%s7 + $0x44] sm:$0xf]
    %v1176 = vld [vmem:[%s7 + $0x48] sm:$0xf]
    %v1177 = vld [vmem:[%s7 + $0x4c] sm:$0xf]
    %v1178 = vld [vmem:[%s7 + $0x50] sm:$0xf]
    %v1179 = vld [vmem:[%s7 + $0x54] sm:$0xf]
    %v1180 = vld [vmem:[%s7 + $0x58] sm:$0xf]
    %v1181 = vld [vmem:[%s7 + $0x5c] sm:$0xf]
    %v1182 = vld [vmem:[%s7 + $0x60] sm:$0xf]
    %v1183 = vld [vmem:[%s7 + $0x64] sm:$0xf]
    %v1184 = vld [vmem:[%s7 + $0x68] sm:$0xf]
    %v1185 = vld [vmem:[%s7 + $0x6c] sm:$0xf]
    %v1186 = vld [vmem:[%s7 + $0x70] sm:$0xf]
    %v1187 = vld [vmem:[%s7 + $0x74] sm:$0xf]
    %v1188 = vld [vmem:[%s7 + $0x78] sm:$0xf]
    %v1189 = vld [vmem:[%s7 + $0x7c] sm:$0xf]
    %v1190 = vld [vmem:[%s8] sm:$0x1]
    %v1192 = vlaneseq
    %v1193 = vshrl.u32 %v1192, 7
    %v1194 = vsub.s32 0, %v1193
    %v1195 = vrot.slane %v1190, %v1194
    %v1229 = vunpack.c.l.b16 %v1158
    %v1230 = vunpack.c.l.b16 %v1159
    %v1231 = vunpack.c.l.b16 %v1160
    %v1232 = vunpack.c.l.b16 %v1161
    %v1233 = vunpack.c.l.b16 %v1162
    %v1234 = vunpack.c.l.b16 %v1163
    %v1235 = vunpack.c.l.b16 %v1164
    %v1236 = vunpack.c.l.b16 %v1165
    %v1237 = vunpack.c.l.b16 %v1166
    %v1238 = vunpack.c.l.b16 %v1167
    %v1239 = vunpack.c.l.b16 %v1168
    %v1240 = vunpack.c.l.b16 %v1169
    %v1241 = vunpack.c.l.b16 %v1170
    %v1242 = vunpack.c.l.b16 %v1171
    %v1243 = vunpack.c.l.b16 %v1172
    %v1244 = vunpack.c.l.b16 %v1173
    %v1245 = vunpack.c.l.b16 %v1174
    %v1246 = vunpack.c.l.b16 %v1175
    %v1247 = vunpack.c.l.b16 %v1176
    %v1248 = vunpack.c.l.b16 %v1177
    %v1249 = vunpack.c.l.b16 %v1178
    %v1250 = vunpack.c.l.b16 %v1179
    %v1251 = vunpack.c.l.b16 %v1180
    %v1252 = vunpack.c.l.b16 %v1181
    %v1253 = vunpack.c.l.b16 %v1182
    %v1254 = vunpack.c.l.b16 %v1183
    %v1255 = vunpack.c.l.b16 %v1184
    %v1256 = vunpack.c.l.b16 %v1185
    %v1257 = vunpack.c.l.b16 %v1186
    %v1258 = vunpack.c.l.b16 %v1187
    %v1259 = vunpack.c.l.b16 %v1188
    %v1260 = vunpack.c.l.b16 %v1189
    %v1261 = vpack.c.b16 %v1230, %v1229
    %v1262 = vpack.c.b16 %v1232, %v1231
    %v1263 = vpack.c.b16 %v1234, %v1233
    %v1264 = vpack.c.b16 %v1236, %v1235
    %v1265 = vpack.c.b16 %v1238, %v1237
    %v1266 = vpack.c.b16 %v1240, %v1239
    %v1267 = vpack.c.b16 %v1242, %v1241
    %v1268 = vpack.c.b16 %v1244, %v1243
    %v1269 = vpack.c.b16 %v1246, %v1245
    %v1270 = vpack.c.b16 %v1248, %v1247
    %v1271 = vpack.c.b16 %v1250, %v1249
    %v1272 = vpack.c.b16 %v1252, %v1251
    %v1273 = vpack.c.b16 %v1254, %v1253
    %v1274 = vpack.c.b16 %v1256, %v1255
    %v1275 = vpack.c.b16 %v1258, %v1257
    %v1276 = vpack.c.b16 %v1260, %v1259
    %1293 = vmatprep.subr.bf16.mxu0 0
    %1294 = vmatpush1.bf16.msra.mxu0 %v1261
    %1295 = vmatprep.subr.bf16.mxu0 0
    %1296 = vmatpush1.bf16.msra.mxu0 %v1262
    %1297 = vmatprep.subr.bf16.mxu0 0
    %1298 = vmatpush1.bf16.msra.mxu0 %v1263
    %1299 = vmatprep.subr.bf16.mxu0 0
    %1300 = vmatpush1.bf16.msra.mxu0 %v1264
    %1301 = vmatprep.subr.bf16.mxu0 0
    %1302 = vmatpush1.bf16.msra.mxu0 %v1265
    %1303 = vmatprep.subr.bf16.mxu0 0
    %1304 = vmatpush1.bf16.msra.mxu0 %v1266
    %1305 = vmatprep.subr.bf16.mxu0 0
    %1306 = vmatpush1.bf16.msra.mxu0 %v1267
    %1307 = vmatprep.subr.bf16.mxu0 0
    %1308 = vmatpush1.bf16.msra.mxu0 %v1268
    %1309 = vmatprep.subr.bf16.mxu0 0
    %1310 = vmatpush1.bf16.msra.mxu0 %v1269
    %1311 = vmatprep.subr.bf16.mxu0 0
    %1312 = vmatpush1.bf16.msra.mxu0 %v1270
    %1313 = vmatprep.subr.bf16.mxu0 0
    %1314 = vmatpush1.bf16.msra.mxu0 %v1271
    %1315 = vmatprep.subr.bf16.mxu0 0
    %1316 = vmatpush1.bf16.msra.mxu0 %v1272
    %1317 = vmatprep.subr.bf16.mxu0 0
    %1318 = vmatpush1.bf16.msra.mxu0 %v1273
    %1319 = vmatprep.subr.bf16.mxu0 0
    %1320 = vmatpush1.bf16.msra.mxu0 %v1274
    %1321 = vmatprep.subr.bf16.mxu0 0
    %1322 = vmatpush1.bf16.msra.mxu0 %v1275
    %1323 = vmatprep.subr.bf16.mxu0 0
    %1324 = vmatpush1.bf16.msra.mxu0 %v1276
    %1325 = vmatprep.mubr.bf16.mxu0 %v1157
    %1326 = vmatmul.mubr.bf16.gmra.mrb[0].mxu0 %v1156
    %v1327 = vpop.f32.mrb[0].mxu0
    %v1328 = vadd.f32 %v1195, %v1327
    %v1329 = vpop.f32.mrb[0].mxu0
    %v1330 = vpop.f32.mrb[0].mxu0
    %v1331 = vadd.f32 %v1195, %v1330
    %v1332 = vpop.f32.mrb[0].mxu0
    %1333 = vdwg.mxu0
    %v1334 = vmax.f32 %v1328, 0.0
    %v1335 = vmax.f32 %v1331, 0.0
    %v1336 = vsub.f32 %v1334, %v1335
    %v1337 = vand.u32 2147483647, %v1336
    %v1338 = vpack.c.bf16 %v1337, %v1337
    %v1339 = vld [vmem:[%s9] sm:$0xf]
    %v1340 = vld [vmem:[%s9 + $0x4] sm:$0xf]
    %v1341 = vld [vmem:[%s10] sm:$0x1]
    %v1343 = vlaneseq
    %v1344 = vshrl.u32 %v1343, 7
    %v1345 = vsub.s32 0, %v1344
    %v1346 = vrot.slane %v1341, %v1345
    %v1350 = vunpack.c.l.b16 %v1339
    %v1351 = vunpack.c.l.b16 %v1340
    %v1352 = vpack.c.b16 %v1351, %v1350
    %vm1354 = vcmask 130048
    %v1356 = vsel %vm1354, %v1338, 0
    %1358 = vmatprep.subr.bf16.mxu0 0
    %1359 = vmatpush1.bf16.msra.mxu0 %v1352
    %1360 = vmatprep.subr.bf16.mxu0 0
    %1361 = vmatpush1.bf16.msra.mxu0 0
    %1362 = vmatprep.subr.bf16.mxu0 0
    %1363 = vmatpush1.bf16.msra.mxu0 0
    %1364 = vmatprep.subr.bf16.mxu0 0
    %1365 = vmatpush1.bf16.msra.mxu0 0
    %1366 = vmatprep.subr.bf16.mxu0 0
    %1367 = vmatpush1.bf16.msra.mxu0 0
    %1368 = vmatprep.subr.bf16.mxu0 0
    %1369 = vmatpush1.bf16.msra.mxu0 0
    %1370 = vmatprep.subr.bf16.mxu0 0
    %1371 = vmatpush1.bf16.msra.mxu0 0
    %1372 = vmatprep.subr.bf16.mxu0 0
    %1373 = vmatpush1.bf16.msra.mxu0 0
    %1374 = vmatprep.subr.bf16.mxu0 0
    %1375 = vmatpush1.bf16.msra.mxu0 0
    %1376 = vmatprep.subr.bf16.mxu0 0
    %1377 = vmatpush1.bf16.msra.mxu0 0
    %1378 = vmatprep.subr.bf16.mxu0 0
    %1379 = vmatpush1.bf16.msra.mxu0 0
    %1380 = vmatprep.subr.bf16.mxu0 0
    %1381 = vmatpush1.bf16.msra.mxu0 0
    %1382 = vmatprep.subr.bf16.mxu0 0
    %1383 = vmatpush1.bf16.msra.mxu0 0
    %1384 = vmatprep.subr.bf16.mxu0 0
    %1385 = vmatpush1.bf16.msra.mxu0 0
    %1386 = vmatprep.subr.bf16.mxu0 0
    %1387 = vmatpush1.bf16.msra.mxu0 0
    %1388 = vmatprep.subr.bf16.mxu0 0
    %1389 = vmatpush1.bf16.msra.mxu0 0
    %1390 = vmatprep.mubr.bf16.mxu0 0
    %1391 = vmatmul.mubr.bf16.gmra.mrb[0].mxu0 %v1356
    %v1392 = vpop.f32.mrb[0].mxu0
    %v1393 = vadd.f32 %v1346, %v1392
    %v1394 = vpop.f32.mrb[0].mxu0
    %v1395 = vpop.f32.mrb[0].mxu0
    %v1396 = vpop.f32.mrb[0].mxu0
    %1397 = vdwg.mxu0
    %v1398 = vmax.f32 %v1393, 0.0
    %v1399 = vpack.c.bf16 %v1398, %v1398
    %v1400 = vld [vmem:[%s11] sm:$0xf]
    %v1401 = vld [vmem:[%s11 + $0x4] sm:$0xf]
    %v1402 = vld [vmem:[%s11 + $0x8] sm:$0xf]
    %v1403 = vld [vmem:[%s11 + $0xc] sm:$0xf]
    %v1404 = vld [vmem:[%s11 + $0x10] sm:$0xf]
    %v1405 = vld [vmem:[%s11 + $0x14] sm:$0xf]
    %v1406 = vld [vmem:[%s11 + $0x18] sm:$0xf]
    %v1407 = vld [vmem:[%s11 + $0x1c] sm:$0xf]
    %v1408 = vld [vmem:[%s11 + $0x20] sm:$0xf]
    %v1409 = vld [vmem:[%s11 + $0x24] sm:$0xf]
    %v1410 = vld [vmem:[%s11 + $0x28] sm:$0xf]
    %v1411 = vld [vmem:[%s11 + $0x2c] sm:$0xf]
    %v1412 = vld [vmem:[%s11 + $0x30] sm:$0xf]
    %v1413 = vld [vmem:[%s11 + $0x34] sm:$0xf]
    %v1414 = vld [vmem:[%s11 + $0x38] sm:$0xf]
    %v1415 = vld [vmem:[%s11 + $0x3c] sm:$0xf]
    %v1416 = vld [vmem:[%s12] sm:$0x1]
    %v1418 = vlaneseq
    %v1419 = vshrl.u32 %v1418, 7
    %v1420 = vsub.s32 0, %v1419
    %v1421 = vrot.slane %v1416, %v1420
    %v1439 = vunpack.c.l.b16 %v1400
    %v1440 = vunpack.c.l.b16 %v1401
    %v1441 = vunpack.c.l.b16 %v1402
    %v1442 = vunpack.c.l.b16 %v1403
    %v1443 = vunpack.c.l.b16 %v1404
    %v1444 = vunpack.c.l.b16 %v1405
    %v1445 = vunpack.c.l.b16 %v1406
    %v1446 = vunpack.c.l.b16 %v1407
    %v1447 = vunpack.c.l.b16 %v1408
    %v1448 = vunpack.c.l.b16 %v1409
    %v1449 = vunpack.c.l.b16 %v1410
    %v1450 = vunpack.c.l.b16 %v1411
    %v1451 = vunpack.c.l.b16 %v1412
    %v1452 = vunpack.c.l.b16 %v1413
    %v1453 = vunpack.c.l.b16 %v1414
    %v1454 = vunpack.c.l.b16 %v1415
    %v1455 = vpack.c.b16 %v1440, %v1439
    %v1456 = vpack.c.b16 %v1442, %v1441
    %v1457 = vpack.c.b16 %v1444, %v1443
    %v1458 = vpack.c.b16 %v1446, %v1445
    %v1459 = vpack.c.b16 %v1448, %v1447
    %v1460 = vpack.c.b16 %v1450, %v1449
    %v1461 = vpack.c.b16 %v1452, %v1451
    %v1462 = vpack.c.b16 %v1454, %v1453
    %1471 = vmatprep.subr.bf16.mxu0 0
    %1472 = vmatpush1.bf16.msra.mxu0 %v1455
    %1473 = vmatprep.subr.bf16.mxu0 0
    %1474 = vmatpush1.bf16.msra.mxu0 %v1456
    %1475 = vmatprep.subr.bf16.mxu0 0
    %1476 = vmatpush1.bf16.msra.mxu0 %v1457
    %1477 = vmatprep.subr.bf16.mxu0 0
    %1478 = vmatpush1.bf16.msra.mxu0 %v1458
    %1479 = vmatprep.subr.bf16.mxu0 0
    %1480 = vmatpush1.bf16.msra.mxu0 %v1459
    %1481 = vmatprep.subr.bf16.mxu0 0
    %1482 = vmatpush1.bf16.msra.mxu0 %v1460
    %1483 = vmatprep.subr.bf16.mxu0 0
    %1484 = vmatpush1.bf16.msra.mxu0 %v1461
    %1485 = vmatprep.subr.bf16.mxu0 0
    %1486 = vmatpush1.bf16.msra.mxu0 %v1462
    %1487 = vmatprep.subr.bf16.mxu0 0
    %1488 = vmatpush1.bf16.msra.mxu0 0
    %1489 = vmatprep.subr.bf16.mxu0 0
    %1490 = vmatpush1.bf16.msra.mxu0 0
    %1491 = vmatprep.subr.bf16.mxu0 0
    %1492 = vmatpush1.bf16.msra.mxu0 0
    %1493 = vmatprep.subr.bf16.mxu0 0
    %1494 = vmatpush1.bf16.msra.mxu0 0
    %1495 = vmatprep.subr.bf16.mxu0 0
    %1496 = vmatpush1.bf16.msra.mxu0 0
    %1497 = vmatprep.subr.bf16.mxu0 0
    %1498 = vmatpush1.bf16.msra.mxu0 0
    %1499 = vmatprep.subr.bf16.mxu0 0
    %1500 = vmatpush1.bf16.msra.mxu0 0
    %1501 = vmatprep.subr.bf16.mxu0 0
    %1502 = vmatpush1.bf16.msra.mxu0 0
    %1503 = vmatprep.mubr.bf16.mxu0 0
    %1504 = vmatmul.mubr.bf16.gmra.mrb[0].mxu0 %v1399
    %v1505 = vpop.f32.mrb[0].mxu0
    %v1506 = vadd.f32 %v1421, %v1505
    %v1507 = vpop.f32.mrb[0].mxu0
    %v1508 = vpop.f32.mrb[0].mxu0
    %v1509 = vpop.f32.mrb[0].mxu0
    %1510 = vdwg.mxu0
    %v1511 = vxor.u32 %v1506, 2147483648
    %v1512 = vmul.f32 %v1511, 1.442695
    %v1513 = vpow.pop %v1512
    %v1514 = vadd.f32 %v1513, 1.0
    %v1515 = vrcp.pop %v1514
    %v1516 = vmul.f32 1.0, %v1515
    %1517 = vst [vmem:[#allocation7] sm:$0xff] %v1516
    // Predicated region
    $region62: #{tpu_custom_call.1} parent=1 // pred_check
      _
    $region63: #{tpu_custom_call.1} parent=1 // pred_check_branch
      %1519 = sbr.rel (0) target = $region65
    $region64: #{tpu_custom_call.1} parent=1 // pred_region
      %s1521 = ssub.s32 128, 128
      %1522 = vsyncadd [#allocation4], %s1521
      %s1524 = sshll.u32 [#allocation7], 4
      %s1525 = int_to_ptr.vmem [resolvable:$true] %s1524
      %1527 = dma.vmem_to_hbm [thread:$0]  %s1525, 128, %s13, [#allocation4]
    $region65: #{tpu_custom_call.1} parent=1 // pred_fallthru
      _
    // Predicated region
    $region66: #{tpu_custom_call.1} parent=1 // pred_check
      _
    $region67: #{tpu_custom_call.1} parent=1 // pred_check_branch
      %1529 = sbr.rel (0) target = $region69
    $region68: #{tpu_custom_call.1} parent=1 // pred_region
      %1530 = dma.done [#allocation4], 128
    $region69: #{tpu_custom_call.1} parent=1 // pred_fallthru
      _
    %1531 = vsyncpa [#allocation3], 1
    %1532 = vsyncpa [#allocation6], 1
    %1533 = vsyncpa [#allocation4], 1

</llo_original>
